<compile_context>
chip_gen: v7x
topology: tpu7x:2x2x1
jax: 0.10.0
libtpu: 0.0.40
codegen_flags: <defaults>
</compile_context>

<pallas_src>
import functools

import jax
import jax.numpy as jnp
import numpy as np
from jax import lax
from jax.experimental import pallas as pl
from jax.experimental.pallas import tpu as pltpu


def _round_up(x, m):
    return (x + m - 1) // m * m


def _lstm_recurrent_kernel(gx_ref, whh_hbm_ref, out_ref, h_out_ref, c_out_ref,
                           h_sc, c_sc, whh_vmem, dma_sem, *,
                           t_total, needs_mask, unroll):
    """Recurrent part of one LSTM layer.  Grid = (Tp // Tc,), sequential ("arbitrary").

    gx_ref      : (Tc, Bp, 4*Hp)  precomputed x @ W_ih^T + b_ih + b_hh (f32 or bf16)
    whh_hbm_ref : (Hp, 4*Hp)      W_hh^T left in HBM (pl.ANY); copied once to whh_vmem
    out_ref     : (Tc, Bp, Hp)    per-timestep hidden output for this chunk (f32)
    h_out_ref, c_out_ref : (Bp, Hp) final state (written only on the last chunk)
    h_sc, c_sc  : (Bp, Hp) f32 VMEM scratch carrying the state across chunks
    whh_vmem    : (Hp, 4*Hp)      single-buffered resident recurrent weights
    dma_sem     : DMA semaphore for the one-shot weight copy
    """
    chunk = pl.program_id(0)
    tc = out_ref.shape[0]
    hp = h_sc.shape[-1]

    @pl.when(chunk == 0)
    def _():
        # Zero initial state (nn.LSTM default).  The padded-lane-zero invariant
        # (padded hidden/cell lanes stay exactly 0 through the recurrence) relies on
        # this zero init plus zero-padded weight/bias columns — keep both in sync.
        h_sc[...] = jnp.zeros_like(h_sc)
        c_sc[...] = jnp.zeros_like(c_sc)
        # One-shot HBM -> VMEM weight copy (single resident buffer, no double-buffering).
        cp = pltpu.make_async_copy(whh_hbm_ref, whh_vmem, dma_sem)
        cp.start()
        cp.wait()

    # Carry (h, c) in registers across the chunk; touch scratch only at the edges.
    h0 = h_sc[...]
    c0 = c_sc[...]

    def step(t, carry):
        h_prev, c_prev = carry
        w = whh_vmem[...]
        # Only the recurrent matmul lives in the serial time loop; the input
        # projection (and bias) was hoisted into gx.
        gates = gx_ref[t].astype(jnp.float32) + jnp.dot(
            h_prev.astype(w.dtype), w, preferred_element_type=jnp.float32)   # (Bp, 4Hp)
        i_g = jax.nn.sigmoid(gates[:, 0 * hp:1 * hp])
        f_g = jax.nn.sigmoid(gates[:, 1 * hp:2 * hp])
        g_g = jnp.tanh(gates[:, 2 * hp:3 * hp])
        o_g = jax.nn.sigmoid(gates[:, 3 * hp:4 * hp])
        c_new = f_g * c_prev + i_g * g_g
        h_new = o_g * jnp.tanh(c_new)
        if needs_mask:
            # Time axis was padded up to a multiple of Tc: freeze (h, c) past true T.
            keep = ((chunk * tc + t) < t_total).astype(jnp.float32)
            h_new = keep * h_new + (1.0 - keep) * h_prev
            c_new = keep * c_new + (1.0 - keep) * c_prev
        out_ref[t] = h_new.astype(out_ref.dtype)
        return (h_new, c_new)

    h_fin, c_fin = lax.fori_loop(0, tc, step, (h0, c0), unroll=unroll)
    h_sc[...] = h_fin
    c_sc[...] = c_fin

    @pl.when(chunk == pl.num_programs(0) - 1)
    def _():
        h_out_ref[...] = h_fin.astype(h_out_ref.dtype)
        c_out_ref[...] = c_fin.astype(c_out_ref.dtype)


def lstm_layer_pallas(x_pad, w_ih, w_hh, b_ih, b_hh, *, true_t, time_chunk,
                      matmul_dtype=jnp.float32, unroll=None):
    """Run one LSTM layer over a padded, time-major input.

    x_pad : (Tp, Bp, Fin_p) f32, zero-padded in time (rows >= true_t), batch and feature.
    w_ih  : (4H, Fin), w_hh : (4H, H), b_ih / b_hh : (4H,)
    matmul_dtype : dtype of matmul operands AND of the streamed gates_x
                   (bf16 recommended on v6e/v7x, also fine on v5e's MXU).
    Returns padded (out (Tp, Bp, Hp), h_final (Bp, Hp), c_final (Bp, Hp)); slice outside.
    """
    Tp, Bp, Fin_p = x_pad.shape
    H = w_hh.shape[1]
    Fin = w_ih.shape[1]
    Hp = _round_up(H, 128)      # per-gate lane multiple
    Tc = time_chunk
    assert Tp % Tc == 0
    needs_mask = (Tp != true_t)
    gate_dtype = jnp.float32 if matmul_dtype == jnp.float32 else matmul_dtype
    if unroll is None:
        # Full unroll for small tiles; partial unroll to bound vreg pressure otherwise.
        unroll = True if (Hp <= 256 and Bp <= 8) else 2

    w_ih = jnp.asarray(w_ih, jnp.float32)
    w_hh = jnp.asarray(w_hh, jnp.float32)
    bias = jnp.asarray(b_ih, jnp.float32) + jnp.asarray(b_hh, jnp.float32)

    # Fold the per-gate 128-lane padding (and input-feature padding) into the weights
    # and bias BEFORE the projection, so gates_x is produced directly in its final
    # layout (no pad/reshape round-trip of the largest intermediate).  Padded
    # columns/rows are zero -> padded hidden lanes stay exactly zero.
    w_ih_t = jnp.pad(w_ih.T.reshape(Fin, 4, H),
                     ((0, Fin_p - Fin), (0, 0), (0, Hp - H))).reshape(Fin_p, 4 * Hp)
    bias_p = jnp.pad(bias.reshape(4, H), ((0, 0), (0, Hp - H))).reshape(4 * Hp)
    whh_t = jnp.pad(w_hh.T.reshape(H, 4, H),
                    ((0, Hp - H), (0, 0), (0, Hp - H))).reshape(Hp, 4 * Hp)

    # Hoisted input projection: one large MXU matmul, DEFAULT precision; optional bf16
    # operands with an f32 accumulator.
    gates_x = jnp.dot(x_pad.reshape(Tp * Bp, Fin_p).astype(matmul_dtype),
                      w_ih_t.astype(matmul_dtype),
                      preferred_element_type=jnp.float32) + bias_p
    gates_x = gates_x.reshape(Tp, Bp, 4 * Hp).astype(gate_dtype)
    whh_t = whh_t.astype(matmul_dtype)

    # Rough VMEM budget: double-buffered gates/out streams + resident weights + state.
    vmem_need = (2 * Tc * Bp * 4 * Hp * jnp.dtype(gate_dtype).itemsize
                 + 2 * Tc * Bp * Hp * 4
                 + Hp * 4 * Hp * jnp.dtype(matmul_dtype).itemsize
                 + 6 * Bp * Hp * 4)
    vmem_limit = int(min(max(int(vmem_need * 1.5) + (4 << 20), 32 << 20), 100 << 20))

    kernel = functools.partial(_lstm_recurrent_kernel, t_total=true_t,
                               needs_mask=needs_mask, unroll=unroll)

    out_p, h_p, c_p = pl.pallas_call(
        kernel,
        out_shape=(jax.ShapeDtypeStruct((Tp, Bp, Hp), jnp.float32),
                   jax.ShapeDtypeStruct((Bp, Hp), jnp.float32),
                   jax.ShapeDtypeStruct((Bp, Hp), jnp.float32)),
        grid_spec=pltpu.PrefetchScalarGridSpec(
            num_scalar_prefetch=0,
            grid=(Tp // Tc,),
            in_specs=[
                pl.BlockSpec((Tc, Bp, 4 * Hp), lambda c: (c, 0, 0)),  # gate slabs, streamed
                pl.BlockSpec(memory_space=pl.ANY),                    # W_hh^T stays in HBM
            ],
            out_specs=(
                pl.BlockSpec((Tc, Bp, Hp), lambda c: (c, 0, 0)),      # per-chunk hidden
                pl.BlockSpec((Bp, Hp), lambda c: (0, 0)),             # final h (last write)
                pl.BlockSpec((Bp, Hp), lambda c: (0, 0)),             # final c (last write)
            ),
            scratch_shapes=[
                pltpu.VMEM((Bp, Hp), jnp.float32),                    # h carry
                pltpu.VMEM((Bp, Hp), jnp.float32),                    # c carry
                pltpu.VMEM((Hp, 4 * Hp), matmul_dtype),               # resident W_hh^T
                pltpu.SemaphoreType.DMA,                              # one-shot weight copy
            ]),
        compiler_params=pltpu.CompilerParams(
            # The time recurrence is inherently sequential.
            dimension_semantics=("arbitrary",),
            vmem_limit_bytes=vmem_limit),
    )(gates_x, whh_t)

    return out_p, h_p, c_p


def lstm_encoder_forward(x_btf, params, *, matmul_dtype=jnp.float32, time_chunk_cap=32):
    """Equivalent of LSTM_Encoder.forward.

    x_btf : (batch, seq, feature)  (batch_first=True)
    params: list of (w_ih, w_hh, b_ih, b_hh) per layer
    returns (outputs[:, -1, :], hidden (L, B, H), cell (L, B, H))
    """
    B, T, _ = x_btf.shape
    H = params[0][1].shape[1]
    Bp = _round_up(B, 8)
    Tc = min(time_chunk_cap, T)
    Tp = _round_up(T, Tc)

    # Pad batch (sublanes) and time (chunk multiple) once, up front; activations stay
    # padded across layers and are sliced only at the very end.
    x = jnp.transpose(jnp.asarray(x_btf, jnp.float32), (1, 0, 2))   # (T, B, F) time-major
    x = jnp.pad(x, ((0, Tp - T), (0, Bp - B), (0, 0)))

    hs, cs = [], []
    for (w_ih, w_hh, b_ih, b_hh) in params:
        x, h_f, c_f = lstm_layer_pallas(x, w_ih, w_hh, b_ih, b_hh,
                                        true_t=T, time_chunk=Tc,
                                        matmul_dtype=matmul_dtype)
        hs.append(h_f)
        cs.append(c_f)

    last_out = x[T - 1, :B, :H]                         # == outputs[:, -1, :]
    hidden = jnp.stack([h[:B, :H] for h in hs], axis=0)
    cell = jnp.stack([c[:B, :H] for c in cs], axis=0)
    return last_out, hidden, cell


# ---------------- pure-JAX reference (for correctness check) ----------------
def lstm_layer_ref(x_tbf, w_ih, w_hh, b_ih, b_hh):
    T, B, _ = x_tbf.shape
    H = w_hh.shape[1]
    h = jnp.zeros((B, H), jnp.float32)
    c = jnp.zeros((B, H), jnp.float32)
    outs = []
    for t in range(T):
        gates = x_tbf[t] @ w_ih.T + h @ w_hh.T + b_ih + b_hh
        i = jax.nn.sigmoid(gates[:, 0 * H:1 * H])
        f = jax.nn.sigmoid(gates[:, 1 * H:2 * H])
        g = jnp.tanh(gates[:, 2 * H:3 * H])
        o = jax.nn.sigmoid(gates[:, 3 * H:4 * H])
        c = f * c + i * g
        h = o * jnp.tanh(c)
        outs.append(h)
    return jnp.stack(outs, 0), h, c


def lstm_encoder_ref(x_btf, params):
    x = jnp.transpose(x_btf, (1, 0, 2))
    hs, cs = [], []
    for (w_ih, w_hh, b_ih, b_hh) in params:
        x, h, c = lstm_layer_ref(x, w_ih, w_hh, b_ih, b_hh)
        hs.append(h)
        cs.append(c)
    outputs = jnp.transpose(x, (1, 0, 2))
    return outputs[:, -1, :], jnp.stack(hs, 0), jnp.stack(cs, 0)


def _make_params(key, input_size, neural_size, hidden_layer):
    bound = 1.0 / np.sqrt(neural_size)
    params = []
    in_sz = input_size
    for _ in range(hidden_layer):
        k1, k2, k3, k4, key = jax.random.split(key, 5)
        w_ih = jax.random.uniform(k1, (4 * neural_size, in_sz), jnp.float32, -bound, bound)
        w_hh = jax.random.uniform(k2, (4 * neural_size, neural_size), jnp.float32, -bound, bound)
        b_ih = jax.random.uniform(k3, (4 * neural_size,), jnp.float32, -bound, bound)
        b_hh = jax.random.uniform(k4, (4 * neural_size,), jnp.float32, -bound, bound)
        params.append((w_ih, w_hh, b_ih, b_hh))
        in_sz = neural_size
    return params, key


if __name__ == "__main__":
    # Small shapes consistent with the module's forward contract.
    batch, seq = 2, 8
    input_size, neural_size, hidden_layer = 16, 32, 2

    key = jax.random.PRNGKey(0)
    k_x, key = jax.random.split(key)
    x = jax.random.normal(k_x, (batch, seq, input_size), jnp.float32)
    params, key = _make_params(key, input_size, neural_size, hidden_layer)

    # f32 operands (DEFAULT MXU precision; the reference also uses DEFAULT-precision dots).
    last_out, hidden, cell = lstm_encoder_forward(x, params)
    jax.block_until_ready((last_out, hidden, cell))

    r_last, r_hidden, r_cell = lstm_encoder_ref(x, params)
    assert last_out.shape == (batch, neural_size)
    assert hidden.shape == (hidden_layer, batch, neural_size)
    assert cell.shape == (hidden_layer, batch, neural_size)
    np.testing.assert_allclose(np.asarray(last_out), np.asarray(r_last), atol=1e-2, rtol=1e-2)
    np.testing.assert_allclose(np.asarray(hidden), np.asarray(r_hidden), atol=1e-2, rtol=1e-2)
    np.testing.assert_allclose(np.asarray(cell), np.asarray(r_cell), atol=1e-2, rtol=1e-2)

    # bf16 matmul operands + bf16-streamed gates (recommended on v6e/v7x, OK on v5e);
    # state stays f32, so only a mild precision loss vs the f32 reference is expected.
    last_bf, hid_bf, cell_bf = lstm_encoder_forward(x, params, matmul_dtype=jnp.bfloat16)
    jax.block_until_ready((last_bf, hid_bf, cell_bf))
    np.testing.assert_allclose(np.asarray(last_bf), np.asarray(r_last), atol=7e-2, rtol=7e-2)
    np.testing.assert_allclose(np.asarray(hid_bf), np.asarray(r_hidden), atol=7e-2, rtol=7e-2)
    np.testing.assert_allclose(np.asarray(cell_bf), np.asarray(r_cell), atol=7e-2, rtol=7e-2)

    # Awkward sequence length (exercises the padded/masked tail-chunk path, Tc=4, T=7).
    k_x2, key = jax.random.split(key)
    x2 = jax.random.normal(k_x2, (batch, 7, input_size), jnp.float32)
    last2, hid2, cell2 = lstm_encoder_forward(x2, params, time_chunk_cap=4)
    jax.block_until_ready((last2, hid2, cell2))
    r_last2, r_hid2, r_cell2 = lstm_encoder_ref(x2, params)
    np.testing.assert_allclose(np.asarray(last2), np.asarray(r_last2), atol=1e-2, rtol=1e-2)
    np.testing.assert_allclose(np.asarray(hid2), np.asarray(r_hid2), atol=1e-2, rtol=1e-2)
    np.testing.assert_allclose(np.asarray(cell2), np.asarray(r_cell2), atol=1e-2, rtol=1e-2)

    print("KERNEL_OK")
</pallas_src>

<mosaic_0001>
module attributes {stable_mosaic.version = 11 : i64} {
  func.func @_lstm_recurrent_kernel(%arg0: i32, %arg1: memref<8x8x512xf32, #tpu.memory_space<vmem>>, %arg2: memref<128x512xf32, #tpu.memory_space<any>>, %arg3: memref<8x8x128xf32, #tpu.memory_space<vmem>>, %arg4: memref<8x128xf32, #tpu.memory_space<vmem>>, %arg5: memref<8x128xf32, #tpu.memory_space<vmem>>, %arg6: memref<8x128xf32, #tpu.memory_space<vmem>>, %arg7: memref<8x128xf32, #tpu.memory_space<vmem>>, %arg8: memref<128x512xf32, #tpu.memory_space<vmem>>, %arg9: memref<!tpu.dma_semaphore, #tpu.memory_space<semaphore_mem>>) attributes {dimension_semantics = [#tpu.dimension_semantics<arbitrary>], iteration_bounds = array<i64: 1>, scalar_prefetch = 0 : i64, scratch_operands = 4 : i64, tpu.core_type = #tpu.core_type<tc>, window_params = [{transform_indices = @transform_0, window_bounds = array<i64: 8, 8, 512>}, {}, {transform_indices = @transform_2, window_bounds = array<i64: 8, 8, 128>}, {pipeline_mode = #tpu.pipeline_mode<synchronous>, transform_indices = @transform_3, window_bounds = array<i64: 8, 128>}, {pipeline_mode = #tpu.pipeline_mode<synchronous>, transform_indices = @transform_4, window_bounds = array<i64: 8, 128>}]} {
    %c0_i32 = arith.constant 0 : i32
    %0 = arith.cmpi eq, %arg0, %c0_i32 : i32
    %1 = arith.extui %0 : i1 to i32
    %c0_i32_0 = arith.constant 0 : i32
    %2 = arith.cmpi ne, %1, %c0_i32_0 : i32
    scf.if %2 {
      %cst_90 = arith.constant 0.000000e+00 : f32
      %290 = vector.broadcast %cst_90 : f32 to vector<8x128xf32>
      %c0_91 = arith.constant 0 : index
      %c0_92 = arith.constant 0 : index
      %291 = vector.load %arg6[%c0_91, %c0_92] : memref<8x128xf32, #tpu.memory_space<vmem>>, vector<8x128xf32>
      tpu.vector_store %arg6[%c0_91, %c0_92], %290 {strides = array<i32>} : memref<8x128xf32, #tpu.memory_space<vmem>>, vector<8x128xf32>,
      %cst_93 = arith.constant 0.000000e+00 : f32
      %292 = vector.broadcast %cst_93 : f32 to vector<8x128xf32>
      %c0_94 = arith.constant 0 : index
      %c0_95 = arith.constant 0 : index
      %293 = vector.load %arg7[%c0_94, %c0_95] : memref<8x128xf32, #tpu.memory_space<vmem>>, vector<8x128xf32>
      tpu.vector_store %arg7[%c0_94, %c0_95], %292 {strides = array<i32>} : memref<8x128xf32, #tpu.memory_space<vmem>>, vector<8x128xf32>,
      tpu.enqueue_dma source(%arg2 : memref<128x512xf32, #tpu.memory_space<any>>) target(%arg8 : memref<128x512xf32, #tpu.memory_space<vmem>>) target_semaphore(%arg9 : memref<!tpu.dma_semaphore, #tpu.memory_space<semaphore_mem>>)
      tpu.wait_dma2 semaphore(%arg9 : memref<!tpu.dma_semaphore, #tpu.memory_space<semaphore_mem>>) src(%arg2 : memref<128x512xf32, #tpu.memory_space<any>>) dst(%arg8 : memref<128x512xf32, #tpu.memory_space<vmem>>)
    } else {
    }
    %c0 = arith.constant 0 : index
    %c0_1 = arith.constant 0 : index
    %3 = vector.load %arg6[%c0, %c0_1] : memref<8x128xf32, #tpu.memory_space<vmem>>, vector<8x128xf32>
    %c0_2 = arith.constant 0 : index
    %c0_3 = arith.constant 0 : index
    %4 = vector.load %arg7[%c0_2, %c0_3] : memref<8x128xf32, #tpu.memory_space<vmem>>, vector<8x128xf32>
    %c0_i32_4 = arith.constant 0 : i32
    %c0_5 = arith.constant 0 : index
    %c0_6 = arith.constant 0 : index
    %5 = vector.load %arg8[%c0_5, %c0_6] : memref<128x512xf32, #tpu.memory_space<vmem>>, vector<128x512xf32>
    %6 = arith.index_cast %c0_i32_4 : i32 to index
    %c0_7 = arith.constant 0 : index
    %c0_8 = arith.constant 0 : index
    %7 = vector.load %arg1[%6, %c0_7, %c0_8] : memref<8x8x512xf32, #tpu.memory_space<vmem>>, vector<1x8x512xf32>
    %8 = vector.shape_cast %7 : vector<1x8x512xf32> to vector<8x512xf32>
    %cst = arith.constant dense<0.000000e+00> : vector<8x512xf32>
    %9 = tpu.matmul %3, %5, %cst {dimension_numbers = #tpu.dot_dimension_numbers<[1], [0], [0], [1], [0, 0, 1, 1], [], []>} : vector<8x128xf32>, vector<128x512xf32>, vector<8x512xf32> -> vector<8x512xf32>
    %10 = arith.addf %8, %9 : vector<8x512xf32>
    %11 = vector.extract_strided_slice %10 {offsets = [0, 0], sizes = [8, 128], strides = [1, 1]} : vector<8x512xf32> to vector<8x128xf32>
    %12 = arith.negf %11 : vector<8x128xf32>
    %13 = math.exp %12 : vector<8x128xf32>
    %cst_9 = arith.constant 1.000000e+00 : f32
    %14 = vector.broadcast %cst_9 : f32 to vector<8x128xf32>
    %15 = arith.addf %14, %13 : vector<8x128xf32>
    %16 = arith.divf %14, %15 : vector<8x128xf32>
    %17 = vector.extract_strided_slice %10 {offsets = [0, 128], sizes = [8, 128], strides = [1, 1]} : vector<8x512xf32> to vector<8x128xf32>
    %18 = arith.negf %17 : vector<8x128xf32>
    %19 = math.exp %18 : vector<8x128xf32>
    %cst_10 = arith.constant 1.000000e+00 : f32
    %20 = vector.broadcast %cst_10 : f32 to vector<8x128xf32>
    %21 = arith.addf %20, %19 : vector<8x128xf32>
    %22 = arith.divf %20, %21 : vector<8x128xf32>
    %23 = vector.extract_strided_slice %10 {offsets = [0, 256], sizes = [8, 128], strides = [1, 1]} : vector<8x512xf32> to vector<8x128xf32>
    %24 = math.tanh %23 : vector<8x128xf32>
    %25 = vector.extract_strided_slice %10 {offsets = [0, 384], sizes = [8, 128], strides = [1, 1]} : vector<8x512xf32> to vector<8x128xf32>
    %26 = arith.negf %25 : vector<8x128xf32>
    %27 = math.exp %26 : vector<8x128xf32>
    %cst_11 = arith.constant 1.000000e+00 : f32
    %28 = vector.broadcast %cst_11 : f32 to vector<8x128xf32>
    %29 = arith.addf %28, %27 : vector<8x128xf32>
    %30 = arith.divf %28, %29 : vector<8x128xf32>
    %31 = arith.mulf %22, %4 : vector<8x128xf32>
    %32 = arith.mulf %16, %24 : vector<8x128xf32>
    %33 = arith.addf %31, %32 : vector<8x128xf32>
    %34 = math.tanh %33 : vector<8x128xf32>
    %35 = arith.mulf %30, %34 : vector<8x128xf32>
    %36 = arith.index_cast %c0_i32_4 : i32 to index
    %c0_12 = arith.constant 0 : index
    %c0_13 = arith.constant 0 : index
    %37 = vector.load %arg3[%36, %c0_12, %c0_13] : memref<8x8x128xf32, #tpu.memory_space<vmem>>, vector<1x8x128xf32>
    %38 = vector.shape_cast %37 : vector<1x8x128xf32> to vector<8x128xf32>
    %39 = vector.shape_cast %35 : vector<8x128xf32> to vector<1x8x128xf32>
    tpu.vector_store %arg3[%36, %c0_12, %c0_13], %39 {strides = array<i32>} : memref<8x8x128xf32, #tpu.memory_space<vmem>>, vector<1x8x128xf32>,
    %c1_i32 = arith.constant 1 : i32
    %c0_14 = arith.constant 0 : index
    %c0_15 = arith.constant 0 : index
    %40 = vector.load %arg8[%c0_14, %c0_15] : memref<128x512xf32, #tpu.memory_space<vmem>>, vector<128x512xf32>
    %41 = arith.index_cast %c1_i32 : i32 to index
    %c0_16 = arith.constant 0 : index
    %c0_17 = arith.constant 0 : index
    %42 = vector.load %arg1[%41, %c0_16, %c0_17] : memref<8x8x512xf32, #tpu.memory_space<vmem>>, vector<1x8x512xf32>
    %43 = vector.shape_cast %42 : vector<1x8x512xf32> to vector<8x512xf32>
    %cst_18 = arith.constant dense<0.000000e+00> : vector<8x512xf32>
    %44 = tpu.matmul %35, %40, %cst_18 {dimension_numbers = #tpu.dot_dimension_numbers<[1], [0], [0], [1], [0, 0, 1, 1], [], []>} : vector<8x128xf32>, vector<128x512xf32>, vector<8x512xf32> -> vector<8x512xf32>
    %45 = arith.addf %43, %44 : vector<8x512xf32>
    %46 = vector.extract_strided_slice %45 {offsets = [0, 0], sizes = [8, 128], strides = [1, 1]} : vector<8x512xf32> to vector<8x128xf32>
    %47 = arith.negf %46 : vector<8x128xf32>
    %48 = math.exp %47 : vector<8x128xf32>
    %cst_19 = arith.constant 1.000000e+00 : f32
    %49 = vector.broadcast %cst_19 : f32 to vector<8x128xf32>
    %50 = arith.addf %49, %48 : vector<8x128xf32>
    %51 = arith.divf %49, %50 : vector<8x128xf32>
    %52 = vector.extract_strided_slice %45 {offsets = [0, 128], sizes = [8, 128], strides = [1, 1]} : vector<8x512xf32> to vector<8x128xf32>
    %53 = arith.negf %52 : vector<8x128xf32>
    %54 = math.exp %53 : vector<8x128xf32>
    %cst_20 = arith.constant 1.000000e+00 : f32
    %55 = vector.broadcast %cst_20 : f32 to vector<8x128xf32>
    %56 = arith.addf %55, %54 : vector<8x128xf32>
    %57 = arith.divf %55, %56 : vector<8x128xf32>
    %58 = vector.extract_strided_slice %45 {offsets = [0, 256], sizes = [8, 128], strides = [1, 1]} : vector<8x512xf32> to vector<8x128xf32>
    %59 = math.tanh %58 : vector<8x128xf32>
    %60 = vector.extract_strided_slice %45 {offsets = [0, 384], sizes = [8, 128], strides = [1, 1]} : vector<8x512xf32> to vector<8x128xf32>
    %61 = arith.negf %60 : vector<8x128xf32>
    %62 = math.exp %61 : vector<8x128xf32>
    %cst_21 = arith.constant 1.000000e+00 : f32
    %63 = vector.broadcast %cst_21 : f32 to vector<8x128xf32>
    %64 = arith.addf %63, %62 : vector<8x128xf32>
    %65 = arith.divf %63, %64 : vector<8x128xf32>
    %66 = arith.mulf %57, %33 : vector<8x128xf32>
    %67 = arith.mulf %51, %59 : vector<8x128xf32>
    %68 = arith.addf %66, %67 : vector<8x128xf32>
    %69 = math.tanh %68 : vector<8x128xf32>
    %70 = arith.mulf %65, %69 : vector<8x128xf32>
    %71 = arith.index_cast %c1_i32 : i32 to index
    %c0_22 = arith.constant 0 : index
    %c0_23 = arith.constant 0 : index
    %72 = vector.load %arg3[%71, %c0_22, %c0_23] : memref<8x8x128xf32, #tpu.memory_space<vmem>>, vector<1x8x128xf32>
    %73 = vector.shape_cast %72 : vector<1x8x128xf32> to vector<8x128xf32>
    %74 = vector.shape_cast %70 : vector<8x128xf32> to vector<1x8x128xf32>
    tpu.vector_store %arg3[%71, %c0_22, %c0_23], %74 {strides = array<i32>} : memref<8x8x128xf32, #tpu.memory_space<vmem>>, vector<1x8x128xf32>,
    %c2_i32 = arith.constant 2 : i32
    %c0_24 = arith.constant 0 : index
    %c0_25 = arith.constant 0 : index
    %75 = vector.load %arg8[%c0_24, %c0_25] : memref<128x512xf32, #tpu.memory_space<vmem>>, vector<128x512xf32>
    %76 = arith.index_cast %c2_i32 : i32 to index
    %c0_26 = arith.constant 0 : index
    %c0_27 = arith.constant 0 : index
    %77 = vector.load %arg1[%76, %c0_26, %c0_27] : memref<8x8x512xf32, #tpu.memory_space<vmem>>, vector<1x8x512xf32>
    %78 = vector.shape_cast %77 : vector<1x8x512xf32> to vector<8x512xf32>
    %cst_28 = arith.constant dense<0.000000e+00> : vector<8x512xf32>
    %79 = tpu.matmul %70, %75, %cst_28 {dimension_numbers = #tpu.dot_dimension_numbers<[1], [0], [0], [1], [0, 0, 1, 1], [], []>} : vector<8x128xf32>, vector<128x512xf32>, vector<8x512xf32> -> vector<8x512xf32>
    %80 = arith.addf %78, %79 : vector<8x512xf32>
    %81 = vector.extract_strided_slice %80 {offsets = [0, 0], sizes = [8, 128], strides = [1, 1]} : vector<8x512xf32> to vector<8x128xf32>
    %82 = arith.negf %81 : vector<8x128xf32>
    %83 = math.exp %82 : vector<8x128xf32>
    %cst_29 = arith.constant 1.000000e+00 : f32
    %84 = vector.broadcast %cst_29 : f32 to vector<8x128xf32>
    %85 = arith.addf %84, %83 : vector<8x128xf32>
    %86 = arith.divf %84, %85 : vector<8x128xf32>
    %87 = vector.extract_strided_slice %80 {offsets = [0, 128], sizes = [8, 128], strides = [1, 1]} : vector<8x512xf32> to vector<8x128xf32>
    %88 = arith.negf %87 : vector<8x128xf32>
    %89 = math.exp %88 : vector<8x128xf32>
    %cst_30 = arith.constant 1.000000e+00 : f32
    %90 = vector.broadcast %cst_30 : f32 to vector<8x128xf32>
    %91 = arith.addf %90, %89 : vector<8x128xf32>
    %92 = arith.divf %90, %91 : vector<8x128xf32>
    %93 = vector.extract_strided_slice %80 {offsets = [0, 256], sizes = [8, 128], strides = [1, 1]} : vector<8x512xf32> to vector<8x128xf32>
    %94 = math.tanh %93 : vector<8x128xf32>
    %95 = vector.extract_strided_slice %80 {offsets = [0, 384], sizes = [8, 128], strides = [1, 1]} : vector<8x512xf32> to vector<8x128xf32>
    %96 = arith.negf %95 : vector<8x128xf32>
    %97 = math.exp %96 : vector<8x128xf32>
    %cst_31 = arith.constant 1.000000e+00 : f32
    %98 = vector.broadcast %cst_31 : f32 to vector<8x128xf32>
    %99 = arith.addf %98, %97 : vector<8x128xf32>
    %100 = arith.divf %98, %99 : vector<8x128xf32>
    %101 = arith.mulf %92, %68 : vector<8x128xf32>
    %102 = arith.mulf %86, %94 : vector<8x128xf32>
    %103 = arith.addf %101, %102 : vector<8x128xf32>
    %104 = math.tanh %103 : vector<8x128xf32>
    %105 = arith.mulf %100, %104 : vector<8x128xf32>
    %106 = arith.index_cast %c2_i32 : i32 to index
    %c0_32 = arith.constant 0 : index
    %c0_33 = arith.constant 0 : index
    %107 = vector.load %arg3[%106, %c0_32, %c0_33] : memref<8x8x128xf32, #tpu.memory_space<vmem>>, vector<1x8x128xf32>
    %108 = vector.shape_cast %107 : vector<1x8x128xf32> to vector<8x128xf32>
    %109 = vector.shape_cast %105 : vector<8x128xf32> to vector<1x8x128xf32>
    tpu.vector_store %arg3[%106, %c0_32, %c0_33], %109 {strides = array<i32>} : memref<8x8x128xf32, #tpu.memory_space<vmem>>, vector<1x8x128xf32>,
    %c3_i32 = arith.constant 3 : i32
    %c0_34 = arith.constant 0 : index
    %c0_35 = arith.constant 0 : index
    %110 = vector.load %arg8[%c0_34, %c0_35] : memref<128x512xf32, #tpu.memory_space<vmem>>, vector<128x512xf32>
    %111 = arith.index_cast %c3_i32 : i32 to index
    %c0_36 = arith.constant 0 : index
    %c0_37 = arith.constant 0 : index
    %112 = vector.load %arg1[%111, %c0_36, %c0_37] : memref<8x8x512xf32, #tpu.memory_space<vmem>>, vector<1x8x512xf32>
    %113 = vector.shape_cast %112 : vector<1x8x512xf32> to vector<8x512xf32>
    %cst_38 = arith.constant dense<0.000000e+00> : vector<8x512xf32>
    %114 = tpu.matmul %105, %110, %cst_38 {dimension_numbers = #tpu.dot_dimension_numbers<[1], [0], [0], [1], [0, 0, 1, 1], [], []>} : vector<8x128xf32>, vector<128x512xf32>, vector<8x512xf32> -> vector<8x512xf32>
    %115 = arith.addf %113, %114 : vector<8x512xf32>
    %116 = vector.extract_strided_slice %115 {offsets = [0, 0], sizes = [8, 128], strides = [1, 1]} : vector<8x512xf32> to vector<8x128xf32>
    %117 = arith.negf %116 : vector<8x128xf32>
    %118 = math.exp %117 : vector<8x128xf32>
    %cst_39 = arith.constant 1.000000e+00 : f32
    %119 = vector.broadcast %cst_39 : f32 to vector<8x128xf32>
    %120 = arith.addf %119, %118 : vector<8x128xf32>
    %121 = arith.divf %119, %120 : vector<8x128xf32>
    %122 = vector.extract_strided_slice %115 {offsets = [0, 128], sizes = [8, 128], strides = [1, 1]} : vector<8x512xf32> to vector<8x128xf32>
    %123 = arith.negf %122 : vector<8x128xf32>
    %124 = math.exp %123 : vector<8x128xf32>
    %cst_40 = arith.constant 1.000000e+00 : f32
    %125 = vector.broadcast %cst_40 : f32 to vector<8x128xf32>
    %126 = arith.addf %125, %124 : vector<8x128xf32>
    %127 = arith.divf %125, %126 : vector<8x128xf32>
    %128 = vector.extract_strided_slice %115 {offsets = [0, 256], sizes = [8, 128], strides = [1, 1]} : vector<8x512xf32> to vector<8x128xf32>
    %129 = math.tanh %128 : vector<8x128xf32>
    %130 = vector.extract_strided_slice %115 {offsets = [0, 384], sizes = [8, 128], strides = [1, 1]} : vector<8x512xf32> to vector<8x128xf32>
    %131 = arith.negf %130 : vector<8x128xf32>
    %132 = math.exp %131 : vector<8x128xf32>
    %cst_41 = arith.constant 1.000000e+00 : f32
    %133 = vector.broadcast %cst_41 : f32 to vector<8x128xf32>
    %134 = arith.addf %133, %132 : vector<8x128xf32>
    %135 = arith.divf %133, %134 : vector<8x128xf32>
    %136 = arith.mulf %127, %103 : vector<8x128xf32>
    %137 = arith.mulf %121, %129 : vector<8x128xf32>
    %138 = arith.addf %136, %137 : vector<8x128xf32>
    %139 = math.tanh %138 : vector<8x128xf32>
    %140 = arith.mulf %135, %139 : vector<8x128xf32>
    %141 = arith.index_cast %c3_i32 : i32 to index
    %c0_42 = arith.constant 0 : index
    %c0_43 = arith.constant 0 : index
    %142 = vector.load %arg3[%141, %c0_42, %c0_43] : memref<8x8x128xf32, #tpu.memory_space<vmem>>, vector<1x8x128xf32>
    %143 = vector.shape_cast %142 : vector<1x8x128xf32> to vector<8x128xf32>
    %144 = vector.shape_cast %140 : vector<8x128xf32> to vector<1x8x128xf32>
    tpu.vector_store %arg3[%141, %c0_42, %c0_43], %144 {strides = array<i32>} : memref<8x8x128xf32, #tpu.memory_space<vmem>>, vector<1x8x128xf32>,
    %c4_i32 = arith.constant 4 : i32
    %c0_44 = arith.constant 0 : index
    %c0_45 = arith.constant 0 : index
    %145 = vector.load %arg8[%c0_44, %c0_45] : memref<128x512xf32, #tpu.memory_space<vmem>>, vector<128x512xf32>
    %146 = arith.index_cast %c4_i32 : i32 to index
    %c0_46 = arith.constant 0 : index
    %c0_47 = arith.constant 0 : index
    %147 = vector.load %arg1[%146, %c0_46, %c0_47] : memref<8x8x512xf32, #tpu.memory_space<vmem>>, vector<1x8x512xf32>
    %148 = vector.shape_cast %147 : vector<1x8x512xf32> to vector<8x512xf32>
    %cst_48 = arith.constant dense<0.000000e+00> : vector<8x512xf32>
    %149 = tpu.matmul %140, %145, %cst_48 {dimension_numbers = #tpu.dot_dimension_numbers<[1], [0], [0], [1], [0, 0, 1, 1], [], []>} : vector<8x128xf32>, vector<128x512xf32>, vector<8x512xf32> -> vector<8x512xf32>
    %150 = arith.addf %148, %149 : vector<8x512xf32>
    %151 = vector.extract_strided_slice %150 {offsets = [0, 0], sizes = [8, 128], strides = [1, 1]} : vector<8x512xf32> to vector<8x128xf32>
    %152 = arith.negf %151 : vector<8x128xf32>
    %153 = math.exp %152 : vector<8x128xf32>
    %cst_49 = arith.constant 1.000000e+00 : f32
    %154 = vector.broadcast %cst_49 : f32 to vector<8x128xf32>
    %155 = arith.addf %154, %153 : vector<8x128xf32>
    %156 = arith.divf %154, %155 : vector<8x128xf32>
    %157 = vector.extract_strided_slice %150 {offsets = [0, 128], sizes = [8, 128], strides = [1, 1]} : vector<8x512xf32> to vector<8x128xf32>
    %158 = arith.negf %157 : vector<8x128xf32>
    %159 = math.exp %158 : vector<8x128xf32>
    %cst_50 = arith.constant 1.000000e+00 : f32
    %160 = vector.broadcast %cst_50 : f32 to vector<8x128xf32>
    %161 = arith.addf %160, %159 : vector<8x128xf32>
    %162 = arith.divf %160, %161 : vector<8x128xf32>
    %163 = vector.extract_strided_slice %150 {offsets = [0, 256], sizes = [8, 128], strides = [1, 1]} : vector<8x512xf32> to vector<8x128xf32>
    %164 = math.tanh %163 : vector<8x128xf32>
    %165 = vector.extract_strided_slice %150 {offsets = [0, 384], sizes = [8, 128], strides = [1, 1]} : vector<8x512xf32> to vector<8x128xf32>
    %166 = arith.negf %165 : vector<8x128xf32>
    %167 = math.exp %166 : vector<8x128xf32>
    %cst_51 = arith.constant 1.000000e+00 : f32
    %168 = vector.broadcast %cst_51 : f32 to vector<8x128xf32>
    %169 = arith.addf %168, %167 : vector<8x128xf32>
    %170 = arith.divf %168, %169 : vector<8x128xf32>
    %171 = arith.mulf %162, %138 : vector<8x128xf32>
    %172 = arith.mulf %156, %164 : vector<8x128xf32>
    %173 = arith.addf %171, %172 : vector<8x128xf32>
    %174 = math.tanh %173 : vector<8x128xf32>
    %175 = arith.mulf %170, %174 : vector<8x128xf32>
    %176 = arith.index_cast %c4_i32 : i32 to index
    %c0_52 = arith.constant 0 : index
    %c0_53 = arith.constant 0 : index
    %177 = vector.load %arg3[%176, %c0_52, %c0_53] : memref<8x8x128xf32, #tpu.memory_space<vmem>>, vector<1x8x128xf32>
    %178 = vector.shape_cast %177 : vector<1x8x128xf32> to vector<8x128xf32>
    %179 = vector.shape_cast %175 : vector<8x128xf32> to vector<1x8x128xf32>
    tpu.vector_store %arg3[%176, %c0_52, %c0_53], %179 {strides = array<i32>} : memref<8x8x128xf32, #tpu.memory_space<vmem>>, vector<1x8x128xf32>,
    %c5_i32 = arith.constant 5 : i32
    %c0_54 = arith.constant 0 : index
    %c0_55 = arith.constant 0 : index
    %180 = vector.load %arg8[%c0_54, %c0_55] : memref<128x512xf32, #tpu.memory_space<vmem>>, vector<128x512xf32>
    %181 = arith.index_cast %c5_i32 : i32 to index
    %c0_56 = arith.constant 0 : index
    %c0_57 = arith.constant 0 : index
    %182 = vector.load %arg1[%181, %c0_56, %c0_57] : memref<8x8x512xf32, #tpu.memory_space<vmem>>, vector<1x8x512xf32>
    %183 = vector.shape_cast %182 : vector<1x8x512xf32> to vector<8x512xf32>
    %cst_58 = arith.constant dense<0.000000e+00> : vector<8x512xf32>
    %184 = tpu.matmul %175, %180, %cst_58 {dimension_numbers = #tpu.dot_dimension_numbers<[1], [0], [0], [1], [0, 0, 1, 1], [], []>} : vector<8x128xf32>, vector<128x512xf32>, vector<8x512xf32> -> vector<8x512xf32>
    %185 = arith.addf %183, %184 : vector<8x512xf32>
    %186 = vector.extract_strided_slice %185 {offsets = [0, 0], sizes = [8, 128], strides = [1, 1]} : vector<8x512xf32> to vector<8x128xf32>
    %187 = arith.negf %186 : vector<8x128xf32>
    %188 = math.exp %187 : vector<8x128xf32>
    %cst_59 = arith.constant 1.000000e+00 : f32
    %189 = vector.broadcast %cst_59 : f32 to vector<8x128xf32>
    %190 = arith.addf %189, %188 : vector<8x128xf32>
    %191 = arith.divf %189, %190 : vector<8x128xf32>
    %192 = vector.extract_strided_slice %185 {offsets = [0, 128], sizes = [8, 128], strides = [1, 1]} : vector<8x512xf32> to vector<8x128xf32>
    %193 = arith.negf %192 : vector<8x128xf32>
    %194 = math.exp %193 : vector<8x128xf32>
    %cst_60 = arith.constant 1.000000e+00 : f32
    %195 = vector.broadcast %cst_60 : f32 to vector<8x128xf32>
    %196 = arith.addf %195, %194 : vector<8x128xf32>
    %197 = arith.divf %195, %196 : vector<8x128xf32>
    %198 = vector.extract_strided_slice %185 {offsets = [0, 256], sizes = [8, 128], strides = [1, 1]} : vector<8x512xf32> to vector<8x128xf32>
    %199 = math.tanh %198 : vector<8x128xf32>
    %200 = vector.extract_strided_slice %185 {offsets = [0, 384], sizes = [8, 128], strides = [1, 1]} : vector<8x512xf32> to vector<8x128xf32>
    %201 = arith.negf %200 : vector<8x128xf32>
    %202 = math.exp %201 : vector<8x128xf32>
    %cst_61 = arith.constant 1.000000e+00 : f32
    %203 = vector.broadcast %cst_61 : f32 to vector<8x128xf32>
    %204 = arith.addf %203, %202 : vector<8x128xf32>
    %205 = arith.divf %203, %204 : vector<8x128xf32>
    %206 = arith.mulf %197, %173 : vector<8x128xf32>
    %207 = arith.mulf %191, %199 : vector<8x128xf32>
    %208 = arith.addf %206, %207 : vector<8x128xf32>
    %209 = math.tanh %208 : vector<8x128xf32>
    %210 = arith.mulf %205, %209 : vector<8x128xf32>
    %211 = arith.index_cast %c5_i32 : i32 to index
    %c0_62 = arith.constant 0 : index
    %c0_63 = arith.constant 0 : index
    %212 = vector.load %arg3[%211, %c0_62, %c0_63] : memref<8x8x128xf32, #tpu.memory_space<vmem>>, vector<1x8x128xf32>
    %213 = vector.shape_cast %212 : vector<1x8x128xf32> to vector<8x128xf32>
    %214 = vector.shape_cast %210 : vector<8x128xf32> to vector<1x8x128xf32>
    tpu.vector_store %arg3[%211, %c0_62, %c0_63], %214 {strides = array<i32>} : memref<8x8x128xf32, #tpu.memory_space<vmem>>, vector<1x8x128xf32>,
    %c6_i32 = arith.constant 6 : i32
    %c0_64 = arith.constant 0 : index
    %c0_65 = arith.constant 0 : index
    %215 = vector.load %arg8[%c0_64, %c0_65] : memref<128x512xf32, #tpu.memory_space<vmem>>, vector<128x512xf32>
    %216 = arith.index_cast %c6_i32 : i32 to index
    %c0_66 = arith.constant 0 : index
    %c0_67 = arith.constant 0 : index
    %217 = vector.load %arg1[%216, %c0_66, %c0_67] : memref<8x8x512xf32, #tpu.memory_space<vmem>>, vector<1x8x512xf32>
    %218 = vector.shape_cast %217 : vector<1x8x512xf32> to vector<8x512xf32>
    %cst_68 = arith.constant dense<0.000000e+00> : vector<8x512xf32>
    %219 = tpu.matmul %210, %215, %cst_68 {dimension_numbers = #tpu.dot_dimension_numbers<[1], [0], [0], [1], [0, 0, 1, 1], [], []>} : vector<8x128xf32>, vector<128x512xf32>, vector<8x512xf32> -> vector<8x512xf32>
    %220 = arith.addf %218, %219 : vector<8x512xf32>
    %221 = vector.extract_strided_slice %220 {offsets = [0, 0], sizes = [8, 128], strides = [1, 1]} : vector<8x512xf32> to vector<8x128xf32>
    %222 = arith.negf %221 : vector<8x128xf32>
    %223 = math.exp %222 : vector<8x128xf32>
    %cst_69 = arith.constant 1.000000e+00 : f32
    %224 = vector.broadcast %cst_69 : f32 to vector<8x128xf32>
    %225 = arith.addf %224, %223 : vector<8x128xf32>
    %226 = arith.divf %224, %225 : vector<8x128xf32>
    %227 = vector.extract_strided_slice %220 {offsets = [0, 128], sizes = [8, 128], strides = [1, 1]} : vector<8x512xf32> to vector<8x128xf32>
    %228 = arith.negf %227 : vector<8x128xf32>
    %229 = math.exp %228 : vector<8x128xf32>
    %cst_70 = arith.constant 1.000000e+00 : f32
    %230 = vector.broadcast %cst_70 : f32 to vector<8x128xf32>
    %231 = arith.addf %230, %229 : vector<8x128xf32>
    %232 = arith.divf %230, %231 : vector<8x128xf32>
    %233 = vector.extract_strided_slice %220 {offsets = [0, 256], sizes = [8, 128], strides = [1, 1]} : vector<8x512xf32> to vector<8x128xf32>
    %234 = math.tanh %233 : vector<8x128xf32>
    %235 = vector.extract_strided_slice %220 {offsets = [0, 384], sizes = [8, 128], strides = [1, 1]} : vector<8x512xf32> to vector<8x128xf32>
    %236 = arith.negf %235 : vector<8x128xf32>
    %237 = math.exp %236 : vector<8x128xf32>
    %cst_71 = arith.constant 1.000000e+00 : f32
    %238 = vector.broadcast %cst_71 : f32 to vector<8x128xf32>
    %239 = arith.addf %238, %237 : vector<8x128xf32>
    %240 = arith.divf %238, %239 : vector<8x128xf32>
    %241 = arith.mulf %232, %208 : vector<8x128xf32>
    %242 = arith.mulf %226, %234 : vector<8x128xf32>
    %243 = arith.addf %241, %242 : vector<8x128xf32>
    %244 = math.tanh %243 : vector<8x128xf32>
    %245 = arith.mulf %240, %244 : vector<8x128xf32>
    %246 = arith.index_cast %c6_i32 : i32 to index
    %c0_72 = arith.constant 0 : index
    %c0_73 = arith.constant 0 : index
    %247 = vector.load %arg3[%246, %c0_72, %c0_73] : memref<8x8x128xf32, #tpu.memory_space<vmem>>, vector<1x8x128xf32>
    %248 = vector.shape_cast %247 : vector<1x8x128xf32> to vector<8x128xf32>
    %249 = vector.shape_cast %245 : vector<8x128xf32> to vector<1x8x128xf32>
    tpu.vector_store %arg3[%246, %c0_72, %c0_73], %249 {strides = array<i32>} : memref<8x8x128xf32, #tpu.memory_space<vmem>>, vector<1x8x128xf32>,
    %c7_i32 = arith.constant 7 : i32
    %c0_74 = arith.constant 0 : index
    %c0_75 = arith.constant 0 : index
    %250 = vector.load %arg8[%c0_74, %c0_75] : memref<128x512xf32, #tpu.memory_space<vmem>>, vector<128x512xf32>
    %251 = arith.index_cast %c7_i32 : i32 to index
    %c0_76 = arith.constant 0 : index
    %c0_77 = arith.constant 0 : index
    %252 = vector.load %arg1[%251, %c0_76, %c0_77] : memref<8x8x512xf32, #tpu.memory_space<vmem>>, vector<1x8x512xf32>
    %253 = vector.shape_cast %252 : vector<1x8x512xf32> to vector<8x512xf32>
    %cst_78 = arith.constant dense<0.000000e+00> : vector<8x512xf32>
    %254 = tpu.matmul %245, %250, %cst_78 {dimension_numbers = #tpu.dot_dimension_numbers<[1], [0], [0], [1], [0, 0, 1, 1], [], []>} : vector<8x128xf32>, vector<128x512xf32>, vector<8x512xf32> -> vector<8x512xf32>
    %255 = arith.addf %253, %254 : vector<8x512xf32>
    %256 = vector.extract_strided_slice %255 {offsets = [0, 0], sizes = [8, 128], strides = [1, 1]} : vector<8x512xf32> to vector<8x128xf32>
    %257 = arith.negf %256 : vector<8x128xf32>
    %258 = math.exp %257 : vector<8x128xf32>
    %cst_79 = arith.constant 1.000000e+00 : f32
    %259 = vector.broadcast %cst_79 : f32 to vector<8x128xf32>
    %260 = arith.addf %259, %258 : vector<8x128xf32>
    %261 = arith.divf %259, %260 : vector<8x128xf32>
    %262 = vector.extract_strided_slice %255 {offsets = [0, 128], sizes = [8, 128], strides = [1, 1]} : vector<8x512xf32> to vector<8x128xf32>
    %263 = arith.negf %262 : vector<8x128xf32>
    %264 = math.exp %263 : vector<8x128xf32>
    %cst_80 = arith.constant 1.000000e+00 : f32
    %265 = vector.broadcast %cst_80 : f32 to vector<8x128xf32>
    %266 = arith.addf %265, %264 : vector<8x128xf32>
    %267 = arith.divf %265, %266 : vector<8x128xf32>
    %268 = vector.extract_strided_slice %255 {offsets = [0, 256], sizes = [8, 128], strides = [1, 1]} : vector<8x512xf32> to vector<8x128xf32>
    %269 = math.tanh %268 : vector<8x128xf32>
    %270 = vector.extract_strided_slice %255 {offsets = [0, 384], sizes = [8, 128], strides = [1, 1]} : vector<8x512xf32> to vector<8x128xf32>
    %271 = arith.negf %270 : vector<8x128xf32>
    %272 = math.exp %271 : vector<8x128xf32>
    %cst_81 = arith.constant 1.000000e+00 : f32
    %273 = vector.broadcast %cst_81 : f32 to vector<8x128xf32>
    %274 = arith.addf %273, %272 : vector<8x128xf32>
    %275 = arith.divf %273, %274 : vector<8x128xf32>
    %276 = arith.mulf %267, %243 : vector<8x128xf32>
    %277 = arith.mulf %261, %269 : vector<8x128xf32>
    %278 = arith.addf %276, %277 : vector<8x128xf32>
    %279 = math.tanh %278 : vector<8x128xf32>
    %280 = arith.mulf %275, %279 : vector<8x128xf32>
    %281 = arith.index_cast %c7_i32 : i32 to index
    %c0_82 = arith.constant 0 : index
    %c0_83 = arith.constant 0 : index
    %282 = vector.load %arg3[%281, %c0_82, %c0_83] : memref<8x8x128xf32, #tpu.memory_space<vmem>>, vector<1x8x128xf32>
    %283 = vector.shape_cast %282 : vector<1x8x128xf32> to vector<8x128xf32>
    %284 = vector.shape_cast %280 : vector<8x128xf32> to vector<1x8x128xf32>
    tpu.vector_store %arg3[%281, %c0_82, %c0_83], %284 {strides = array<i32>} : memref<8x8x128xf32, #tpu.memory_space<vmem>>, vector<1x8x128xf32>,
    %c8_i32 = arith.constant 8 : i32
    %c0_84 = arith.constant 0 : index
    %c0_85 = arith.constant 0 : index
    %285 = vector.load %arg6[%c0_84, %c0_85] : memref<8x128xf32, #tpu.memory_space<vmem>>, vector<8x128xf32>
    tpu.vector_store %arg6[%c0_84, %c0_85], %280 {strides = array<i32>} : memref<8x128xf32, #tpu.memory_space<vmem>>, vector<8x128xf32>,
    %c0_86 = arith.constant 0 : index
    %c0_87 = arith.constant 0 : index
    %286 = vector.load %arg7[%c0_86, %c0_87] : memref<8x128xf32, #tpu.memory_space<vmem>>, vector<8x128xf32>
    tpu.vector_store %arg7[%c0_86, %c0_87], %278 {strides = array<i32>} : memref<8x128xf32, #tpu.memory_space<vmem>>, vector<8x128xf32>,
    %c0_i32_88 = arith.constant 0 : i32
    %287 = arith.cmpi eq, %arg0, %c0_i32_88 : i32
    %288 = arith.extui %287 : i1 to i32
    %c0_i32_89 = arith.constant 0 : i32
    %289 = arith.cmpi ne, %288, %c0_i32_89 : i32
    scf.if %289 {
      %c0_90 = arith.constant 0 : index
      %c0_91 = arith.constant 0 : index
      %290 = vector.load %arg4[%c0_90, %c0_91] : memref<8x128xf32, #tpu.memory_space<vmem>>, vector<8x128xf32>
      tpu.vector_store %arg4[%c0_90, %c0_91], %280 {strides = array<i32>} : memref<8x128xf32, #tpu.memory_space<vmem>>, vector<8x128xf32>,
      %c0_92 = arith.constant 0 : index
      %c0_93 = arith.constant 0 : index
      %291 = vector.load %arg5[%c0_92, %c0_93] : memref<8x128xf32, #tpu.memory_space<vmem>>, vector<8x128xf32>
      tpu.vector_store %arg5[%c0_92, %c0_93], %278 {strides = array<i32>} : memref<8x128xf32, #tpu.memory_space<vmem>>, vector<8x128xf32>,
    } else {
    }
    return
  }
  func.func @transform_0(%arg0: i32) -> (i32, i32, i32) {
    %c0_i32 = arith.constant 0 : i32
    %c0_i32_0 = arith.constant 0 : i32
    %c0_i32_1 = arith.constant 0 : i32
    return %arg0, %c0_i32, %c0_i32_0 : i32, i32, i32
  }
  func.func @transform_2(%arg0: i32) -> (i32, i32, i32) {
    %c0_i32 = arith.constant 0 : i32
    %c0_i32_0 = arith.constant 0 : i32
    %c0_i32_1 = arith.constant 0 : i32
    return %arg0, %c0_i32, %c0_i32_0 : i32, i32, i32
  }
  func.func @transform_3(%arg0: i32) -> (i32, i32) {
    %c0_i32 = arith.constant 0 : i32
    %c0_i32_0 = arith.constant 0 : i32
    %c0_i32_1 = arith.constant 0 : i32
    return %c0_i32, %c0_i32_0 : i32, i32
  }
  func.func @transform_4(%arg0: i32) -> (i32, i32) {
    %c0_i32 = arith.constant 0 : i32
    %c0_i32_0 = arith.constant 0 : i32
    %c0_i32_1 = arith.constant 0 : i32
    return %c0_i32, %c0_i32_0 : i32, i32
  }
}

</mosaic_0001>

<llo_original>
// kernel: tpu_custom_call.1
$region0: #{tpu_custom_call.1}
  #allocation0 [shape = 'u32[]', space=smem, size = 0x4, offset = 0x4, fixed_abs, tag = 'smem constant byte address 0x4 - core index']
  #allocation1 [shape = 'u32[144,128]{1,0:T(1,128)}', space=vmem, size = 0x12000, scoped, tag = 'internal scratch']
  #allocation2 [shape = 'f32[8,128]{1,0:T(8,128)}', space=vmem, size = 0x1000, scoped, tag = 'scratch operand']
  #allocation3 [shape = 'f32[8,128]{1,0:T(8,128)}', space=vmem, size = 0x1000, scoped, tag = 'scratch operand']
  #allocation4 [shape = 'f32[128,512]{1,0:T(8,128)}', space=vmem, size = 0x40000, scoped, tag = 'scratch operand']
  #allocation5 [shape = 's32[1]{0}', space=sflag, size = 0x4, scoped, tag = 'scratch operand']
  #allocation13 [shape = 's32[]', space=sflag, size = 0x4, offset = 0, fixed_abs, tag = 'sflag constant byte address 0x0 - dummy sync flag']
  #allocation14 [shape = 's32[]', space=sflag, size = 0x4, offset = 0, fixed_abs, tag = 'sflag constant byte address 0x0 - dummy sync flag']
  #allocation15 [shape = 'u32[]', space=smem, size = 0x4, offset = 0x44, fixed_abs, tag = 'smem constant byte address 0x44 - assertion arg 0']
  #allocation16 [shape = 'u32[]', space=smem, size = 0x4, offset = 0x48, fixed_abs, tag = 'smem constant byte address 0x48 - assertion arg 1']
  %s0 = inlined_call_operand.hbm [shape: f32[8,8,512], index: 0, kind: input, shape index: {}]
  %s1 = inlined_call_operand.hbm [shape: f32[128,512], index: 1, kind: input, shape index: {}]
  %s2 = inlined_call_operand.hbm [shape: f32[8,8,128], index: 2, kind: output, shape index: {0}]
  %s3 = inlined_call_operand.hbm [shape: f32[8,128], index: 3, kind: output, shape index: {1}]
  %s4 = inlined_call_operand.hbm [shape: f32[8,128], index: 4, kind: output, shape index: {2}]
  %5 = xla_tuple %s2, %s3, %s4
  %s6 = sld [smem:[#allocation0]]
  $region46: #{tpu_custom_call.1} parent=0
    _
  %s8 = ssub.s32 1, %s6
  %s9 = scalar_select 0, %s8, %s6
  $region1: #{tpu_custom_call.1} parent=0
    #allocation6 [shape = 'u8[131072]{0}', space=vmem, size = 0x20000, scoped, tag = 'input window, operand 0, single buffered']
    #allocation7 [shape = 's32[1]{0}', space=sflag, size = 0x4, scoped, tag = 'scoped memory for tpu_custom_call.1']
    #allocation8 [shape = 's32[1]{0}', space=sflag, size = 0x4, scoped, tag = 'scoped memory for tpu_custom_call.1']
    #allocation9 [shape = 'u8[32768]{0}', space=vmem, size = 0x8000, scoped, tag = 'output window, operand 0, single buffered']
    #allocation10 [shape = 'u8[4096]{0}', space=vmem, size = 0x1000, scoped, tag = 'output window, operand 1, single buffered']
    #allocation11 [shape = 's32[1]{0}', space=sflag, size = 0x4, scoped, tag = 'scoped memory for tpu_custom_call.1']
    #allocation12 [shape = 'u8[4096]{0}', space=vmem, size = 0x1000, scoped, tag = 'output window, operand 2, single buffered']
    %10 = vsyncpa [#allocation7], 0
    %11 = vsyncpa [#allocation8], 0
    %12 = vsyncpa [#allocation11], 0
    // Predicated region
    $region2: #{tpu_custom_call.1} parent=1 // pred_check
      _
    $region3: #{tpu_custom_call.1} parent=1 // pred_check_branch
      %14 = sbr.rel (0) target = $region5
    $region4: #{tpu_custom_call.1} parent=1 // pred_region
      %s16 = ssub.s32 4096, 4096
      %17 = vsyncadd [#allocation7], %s16
      %s18 = sshll.u32 [#allocation6], 4
      %s19 = int_to_ptr.vmem [resolvable:$true] %s18
      %24 = dma.hbm_to_vmem [thread:$0]  %s0, 4096, %s19, [#allocation7], 512, 512, 32
    $region5: #{tpu_custom_call.1} parent=1 // pred_fallthru
      _
    // Predicated region
    $region6: #{tpu_custom_call.1} parent=1 // pred_check
      _
    $region7: #{tpu_custom_call.1} parent=1 // pred_check_branch
      %26 = sbr.rel (0) target = $region9
    $region8: #{tpu_custom_call.1} parent=1 // pred_region
      %27 = dma.done [#allocation7], 4096
    $region9: #{tpu_custom_call.1} parent=1 // pred_fallthru
      _
    %p28 = scmp.eq.s32.totalorder 0, 0
    // Predicated region
    $region10: #{tpu_custom_call.1} parent=1 // pred_check
      %p29 = pneg %p28
    $region11: #{tpu_custom_call.1} parent=1 // pred_check_branch
      %31 = sbr.rel (%p29) target = $region13
    $region12: #{tpu_custom_call.1} parent=1 // pred_region
      %32 = vst [vmem:[#allocation2] sm:$0xff] 0.0
      %33 = vst [vmem:[#allocation3] sm:$0xff] 0.0
      // Predicated region
      $region14: #{tpu_custom_call.1} parent=12 // pred_check
        _
      $region15: #{tpu_custom_call.1} parent=12 // pred_check_branch
        %35 = sbr.rel target = $region17
      $region16: #{tpu_custom_call.1} parent=12 // pred_region
        %36 = sst [smem:[#allocation15]] [#allocation14]
        %37 = sst [smem:[#allocation16]] [#allocation13]
      $region17: #{tpu_custom_call.1} parent=12 // pred_fallthru
        _
      %39 = shalt.err (0)
      %s41 = sshll.u32 [#allocation4], 4
      %s42 = int_to_ptr.vmem [resolvable:$true] %s41
      %44 = dma.hbm_to_vmem [thread:$0]  %s1, 8192, %s42, [#allocation5]
      %s45 = smul.u32 8, 16
      %s46 = smul.u32 %s45, 4
      %s47 = sshll.u32 %s46, 4
      %48 = dma.done [#allocation5], %s47
    $region13: #{tpu_custom_call.1} parent=1 // pred_fallthru
      _
    %v49 = vld [vmem:[#allocation2] sm:$0xff]
    %v50 = vld [vmem:[#allocation3] sm:$0xff]
    %v51 = vld [vmem:[#allocation4] sm:$0xff]
    %v52 = vld [vmem:[#allocation4 + $0x8] sm:$0xff]
    %v53 = vld [vmem:[#allocation4 + $0x10] sm:$0xff]
    %v54 = vld [vmem:[#allocation4 + $0x18] sm:$0xff]
    %v55 = vld [vmem:[#allocation4 + $0x20] sm:$0xff]
    %v56 = vld [vmem:[#allocation4 + $0x28] sm:$0xff]
    %v57 = vld [vmem:[#allocation4 + $0x30] sm:$0xff]
    %v58 = vld [vmem:[#allocation4 + $0x38] sm:$0xff]
    %v59 = vld [vmem:[#allocation4 + $0x40] sm:$0xff]
    %v60 = vld [vmem:[#allocation4 + $0x48] sm:$0xff]
    %v61 = vld [vmem:[#allocation4 + $0x50] sm:$0xff]
    %v62 = vld [vmem:[#allocation4 + $0x58] sm:$0xff]
    %v63 = vld [vmem:[#allocation4 + $0x60] sm:$0xff]
    %v64 = vld [vmem:[#allocation4 + $0x68] sm:$0xff]
    %v65 = vld [vmem:[#allocation4 + $0x70] sm:$0xff]
    %v66 = vld [vmem:[#allocation4 + $0x78] sm:$0xff]
    %v67 = vld [vmem:[#allocation4 + $0x80] sm:$0xff]
    %v68 = vld [vmem:[#allocation4 + $0x88] sm:$0xff]
    %v69 = vld [vmem:[#allocation4 + $0x90] sm:$0xff]
    %v70 = vld [vmem:[#allocation4 + $0x98] sm:$0xff]
    %v71 = vld [vmem:[#allocation4 + $0xa0] sm:$0xff]
    %v72 = vld [vmem:[#allocation4 + $0xa8] sm:$0xff]
    %v73 = vld [vmem:[#allocation4 + $0xb0] sm:$0xff]
    %v74 = vld [vmem:[#allocation4 + $0xb8] sm:$0xff]
    %v75 = vld [vmem:[#allocation4 + $0xc0] sm:$0xff]
    %v76 = vld [vmem:[#allocation4 + $0xc8] sm:$0xff]
    %v77 = vld [vmem:[#allocation4 + $0xd0] sm:$0xff]
    %v78 = vld [vmem:[#allocation4 + $0xd8] sm:$0xff]
    %v79 = vld [vmem:[#allocation4 + $0xe0] sm:$0xff]
    %v80 = vld [vmem:[#allocation4 + $0xe8] sm:$0xff]
    %v81 = vld [vmem:[#allocation4 + $0xf0] sm:$0xff]
    %v82 = vld [vmem:[#allocation4 + $0xf8] sm:$0xff]
    %v83 = vld [vmem:[#allocation4 + $0x100] sm:$0xff]
    %v84 = vld [vmem:[#allocation4 + $0x108] sm:$0xff]
    %v85 = vld [vmem:[#allocation4 + $0x110] sm:$0xff]
    %v86 = vld [vmem:[#allocation4 + $0x118] sm:$0xff]
    %v87 = vld [vmem:[#allocation4 + $0x120] sm:$0xff]
    %v88 = vld [vmem:[#allocation4 + $0x128] sm:$0xff]
    %v89 = vld [vmem:[#allocation4 + $0x130] sm:$0xff]
    %v90 = vld [vmem:[#allocation4 + $0x138] sm:$0xff]
    %v91 = vld [vmem:[#allocation4 + $0x140] sm:$0xff]
    %v92 = vld [vmem:[#allocation4 + $0x148] sm:$0xff]
    %v93 = vld [vmem:[#allocation4 + $0x150] sm:$0xff]
    %v94 = vld [vmem:[#allocation4 + $0x158] sm:$0xff]
    %v95 = vld [vmem:[#allocation4 + $0x160] sm:$0xff]
    %v96 = vld [vmem:[#allocation4 + $0x168] sm:$0xff]
    %v97 = vld [vmem:[#allocation4 + $0x170] sm:$0xff]
    %v98 = vld [vmem:[#allocation4 + $0x178] sm:$0xff]
    %v99 = vld [vmem:[#allocation4 + $0x180] sm:$0xff]
    %v100 = vld [vmem:[#allocation4 + $0x188] sm:$0xff]
    %v101 = vld [vmem:[#allocation4 + $0x190] sm:$0xff]
    %v102 = vld [vmem:[#allocation4 + $0x198] sm:$0xff]
    %v103 = vld [vmem:[#allocation4 + $0x1a0] sm:$0xff]
    %v104 = vld [vmem:[#allocation4 + $0x1a8] sm:$0xff]
    %v105 = vld [vmem:[#allocation4 + $0x1b0] sm:$0xff]
    %v106 = vld [vmem:[#allocation4 + $0x1b8] sm:$0xff]
    %v107 = vld [vmem:[#allocation4 + $0x1c0] sm:$0xff]
    %v108 = vld [vmem:[#allocation4 + $0x1c8] sm:$0xff]
    %v109 = vld [vmem:[#allocation4 + $0x1d0] sm:$0xff]
    %v110 = vld [vmem:[#allocation4 + $0x1d8] sm:$0xff]
    %v111 = vld [vmem:[#allocation4 + $0x1e0] sm:$0xff]
    %v112 = vld [vmem:[#allocation4 + $0x1e8] sm:$0xff]
    %v113 = vld [vmem:[#allocation4 + $0x1f0] sm:$0xff]
    %v114 = vld [vmem:[#allocation4 + $0x1f8] sm:$0xff]
    %v115 = vld [vmem:[#allocation6] sm:$0xff]
    %v116 = vld [vmem:[#allocation6 + $0x8] sm:$0xff]
    %v117 = vld [vmem:[#allocation6 + $0x10] sm:$0xff]
    %v118 = vld [vmem:[#allocation6 + $0x18] sm:$0xff]
    %119 = vmatprep.subr.mxu0 %v52
    %120 = vmatpush1.msra.mxu0 %v51
    %121 = vmatprep.subr.mxu0 %v56
    %122 = vmatpush1.msra.mxu0 %v55
    %123 = vmatprep.subr.mxu0 %v60
    %124 = vmatpush1.msra.mxu0 %v59
    %125 = vmatprep.subr.mxu0 %v64
    %126 = vmatpush1.msra.mxu0 %v63
    %127 = vmatprep.subr.mxu0 %v68
    %128 = vmatpush1.msra.mxu0 %v67
    %129 = vmatprep.subr.mxu0 %v72
    %130 = vmatpush1.msra.mxu0 %v71
    %131 = vmatprep.subr.mxu0 %v76
    %132 = vmatpush1.msra.mxu0 %v75
    %133 = vmatprep.subr.mxu0 %v80
    %134 = vmatpush1.msra.mxu0 %v79
    %135 = vmatprep.subr.mxu0 %v84
    %136 = vmatpush1.msra.mxu0 %v83
    %137 = vmatprep.subr.mxu0 %v88
    %138 = vmatpush1.msra.mxu0 %v87
    %139 = vmatprep.subr.mxu0 %v92
    %140 = vmatpush1.msra.mxu0 %v91
    %141 = vmatprep.subr.mxu0 %v96
    %142 = vmatpush1.msra.mxu0 %v95
    %143 = vmatprep.subr.mxu0 %v100
    %144 = vmatpush1.msra.mxu0 %v99
    %145 = vmatprep.subr.mxu0 %v104
    %146 = vmatpush1.msra.mxu0 %v103
    %147 = vmatprep.subr.mxu0 %v108
    %148 = vmatpush1.msra.mxu0 %v107
    %149 = vmatprep.subr.mxu0 %v112
    %150 = vmatpush1.msra.mxu0 %v111
    %151 = vmatprep.subr.mxu0 0.0
    %152 = vmatpush1.msra.mxu0 0.0
    %153 = vmatprep.subr.mxu0 0.0
    %154 = vmatpush1.msra.mxu0 0.0
    %155 = vmatprep.subr.mxu0 0.0
    %156 = vmatpush1.msra.mxu0 0.0
    %157 = vmatprep.subr.mxu0 0.0
    %158 = vmatpush1.msra.mxu0 0.0
    %159 = vmatprep.subr.mxu0 0.0
    %160 = vmatpush1.msra.mxu0 0.0
    %161 = vmatprep.subr.mxu0 0.0
    %162 = vmatpush1.msra.mxu0 0.0
    %163 = vmatprep.subr.mxu0 0.0
    %164 = vmatpush1.msra.mxu0 0.0
    %165 = vmatprep.subr.mxu0 0.0
    %166 = vmatpush1.msra.mxu0 0.0
    %167 = vmatprep.subr.mxu0 0.0
    %168 = vmatpush1.msra.mxu0 0.0
    %169 = vmatprep.subr.mxu0 0.0
    %170 = vmatpush1.msra.mxu0 0.0
    %171 = vmatprep.subr.mxu0 0.0
    %172 = vmatpush1.msra.mxu0 0.0
    %173 = vmatprep.subr.mxu0 0.0
    %174 = vmatpush1.msra.mxu0 0.0
    %175 = vmatprep.subr.mxu0 0.0
    %176 = vmatpush1.msra.mxu0 0.0
    %177 = vmatprep.subr.mxu0 0.0
    %178 = vmatpush1.msra.mxu0 0.0
    %179 = vmatprep.subr.mxu0 0.0
    %180 = vmatpush1.msra.mxu0 0.0
    %181 = vmatprep.subr.mxu0 0.0
    %182 = vmatpush1.msra.mxu0 0.0
    %183 = vmatprep.mubr.f32.mxu0 0.0
    %184 = vmatmul.mubr.f32.gmra.mrb[0].mxu0 %v49
    %v185 = vpop.f32.mrb[0].mxu0
    %v186 = vadd.f32 0.0, %v185
    %v187 = vpop.f32.mrb[0].mxu0
    %v188 = vadd.f32 0.0, %v187
    %189 = vdwg.mxu0
    %190 = vmatprep.subr.mxu0 %v54
    %191 = vmatpush1.msra.mxu0 %v53
    %192 = vmatprep.subr.mxu0 %v58
    %193 = vmatpush1.msra.mxu0 %v57
    %194 = vmatprep.subr.mxu0 %v62
    %195 = vmatpush1.msra.mxu0 %v61
    %196 = vmatprep.subr.mxu0 %v66
    %197 = vmatpush1.msra.mxu0 %v65
    %198 = vmatprep.subr.mxu0 %v70
    %199 = vmatpush1.msra.mxu0 %v69
    %200 = vmatprep.subr.mxu0 %v74
    %201 = vmatpush1.msra.mxu0 %v73
    %202 = vmatprep.subr.mxu0 %v78
    %203 = vmatpush1.msra.mxu0 %v77
    %204 = vmatprep.subr.mxu0 %v82
    %205 = vmatpush1.msra.mxu0 %v81
    %206 = vmatprep.subr.mxu0 %v86
    %207 = vmatpush1.msra.mxu0 %v85
    %208 = vmatprep.subr.mxu0 %v90
    %209 = vmatpush1.msra.mxu0 %v89
    %210 = vmatprep.subr.mxu0 %v94
    %211 = vmatpush1.msra.mxu0 %v93
    %212 = vmatprep.subr.mxu0 %v98
    %213 = vmatpush1.msra.mxu0 %v97
    %214 = vmatprep.subr.mxu0 %v102
    %215 = vmatpush1.msra.mxu0 %v101
    %216 = vmatprep.subr.mxu0 %v106
    %217 = vmatpush1.msra.mxu0 %v105
    %218 = vmatprep.subr.mxu0 %v110
    %219 = vmatpush1.msra.mxu0 %v109
    %220 = vmatprep.subr.mxu0 %v114
    %221 = vmatpush1.msra.mxu0 %v113
    %222 = vmatprep.subr.mxu0 0.0
    %223 = vmatpush1.msra.mxu0 0.0
    %224 = vmatprep.subr.mxu0 0.0
    %225 = vmatpush1.msra.mxu0 0.0
    %226 = vmatprep.subr.mxu0 0.0
    %227 = vmatpush1.msra.mxu0 0.0
    %228 = vmatprep.subr.mxu0 0.0
    %229 = vmatpush1.msra.mxu0 0.0
    %230 = vmatprep.subr.mxu0 0.0
    %231 = vmatpush1.msra.mxu0 0.0
    %232 = vmatprep.subr.mxu0 0.0
    %233 = vmatpush1.msra.mxu0 0.0
    %234 = vmatprep.subr.mxu0 0.0
    %235 = vmatpush1.msra.mxu0 0.0
    %236 = vmatprep.subr.mxu0 0.0
    %237 = vmatpush1.msra.mxu0 0.0
    %238 = vmatprep.subr.mxu0 0.0
    %239 = vmatpush1.msra.mxu0 0.0
    %240 = vmatprep.subr.mxu0 0.0
    %241 = vmatpush1.msra.mxu0 0.0
    %242 = vmatprep.subr.mxu0 0.0
    %243 = vmatpush1.msra.mxu0 0.0
    %244 = vmatprep.subr.mxu0 0.0
    %245 = vmatpush1.msra.mxu0 0.0
    %246 = vmatprep.subr.mxu0 0.0
    %247 = vmatpush1.msra.mxu0 0.0
    %248 = vmatprep.subr.mxu0 0.0
    %249 = vmatpush1.msra.mxu0 0.0
    %250 = vmatprep.subr.mxu0 0.0
    %251 = vmatpush1.msra.mxu0 0.0
    %252 = vmatprep.subr.mxu0 0.0
    %253 = vmatpush1.msra.mxu0 0.0
    %254 = vmatprep.mubr.f32.mxu0 0.0
    %255 = vmatmul.mubr.f32.gmra.mrb[0].mxu0 %v49
    %v256 = vpop.f32.mrb[0].mxu0
    %v257 = vadd.f32 0.0, %v256
    %v258 = vpop.f32.mrb[0].mxu0
    %v259 = vadd.f32 0.0, %v258
    %260 = vdwg.mxu0
    %v261 = vadd.f32 %v115, %v186
    %v262 = vadd.f32 %v116, %v188
    %v263 = vadd.f32 %v117, %v257
    %v264 = vadd.f32 %v118, %v259
    %v265 = vxor.u32 %v261, 2147483648
    %v266 = vmul.f32 %v265, 1.442695
    %v267 = vpow.pop %v266
    %v268 = vadd.f32 %v267, 1.0
    %v269 = vrcp.pop %v268
    %v270 = vmul.f32 1.0, %v269
    %v271 = vxor.u32 %v262, 2147483648
    %v272 = vmul.f32 %v271, 1.442695
    %v273 = vpow.pop %v272
    %v274 = vadd.f32 %v273, 1.0
    %v275 = vrcp.pop %v274
    %v276 = vmul.f32 1.0, %v275
    %v277 = vtanh.pop %v263
    %v278 = vxor.u32 %v264, 2147483648
    %v279 = vmul.f32 %v278, 1.442695
    %v280 = vpow.pop %v279
    %v281 = vadd.f32 %v280, 1.0
    %v282 = vrcp.pop %v281
    %v283 = vmul.f32 1.0, %v282
    %v284 = vmul.f32 %v276, %v50
    %v285 = vmul.f32 %v270, %v277
    %v286 = vadd.f32 %v284, %v285
    %v287 = vtanh.pop %v286
    %v288 = vmul.f32 %v283, %v287
    %289 = vst [vmem:[#allocation9] sm:$0xff] %v288
    %v290 = vld [vmem:[#allocation4] sm:$0xff]
    %v291 = vld [vmem:[#allocation4 + $0x8] sm:$0xff]
    %v292 = vld [vmem:[#allocation4 + $0x10] sm:$0xff]
    %v293 = vld [vmem:[#allocation4 + $0x18] sm:$0xff]
    %v294 = vld [vmem:[#allocation4 + $0x20] sm:$0xff]
    %v295 = vld [vmem:[#allocation4 + $0x28] sm:$0xff]
    %v296 = vld [vmem:[#allocation4 + $0x30] sm:$0xff]
    %v297 = vld [vmem:[#allocation4 + $0x38] sm:$0xff]
    %v298 = vld [vmem:[#allocation4 + $0x40] sm:$0xff]
    %v299 = vld [vmem:[#allocation4 + $0x48] sm:$0xff]
    %v300 = vld [vmem:[#allocation4 + $0x50] sm:$0xff]
    %v301 = vld [vmem:[#allocation4 + $0x58] sm:$0xff]
    %v302 = vld [vmem:[#allocation4 + $0x60] sm:$0xff]
    %v303 = vld [vmem:[#allocation4 + $0x68] sm:$0xff]
    %v304 = vld [vmem:[#allocation4 + $0x70] sm:$0xff]
    %v305 = vld [vmem:[#allocation4 + $0x78] sm:$0xff]
    %v306 = vld [vmem:[#allocation4 + $0x80] sm:$0xff]
    %v307 = vld [vmem:[#allocation4 + $0x88] sm:$0xff]
    %v308 = vld [vmem:[#allocation4 + $0x90] sm:$0xff]
    %v309 = vld [vmem:[#allocation4 + $0x98] sm:$0xff]
    %v310 = vld [vmem:[#allocation4 + $0xa0] sm:$0xff]
    %v311 = vld [vmem:[#allocation4 + $0xa8] sm:$0xff]
    %v312 = vld [vmem:[#allocation4 + $0xb0] sm:$0xff]
    %v313 = vld [vmem:[#allocation4 + $0xb8] sm:$0xff]
    %v314 = vld [vmem:[#allocation4 + $0xc0] sm:$0xff]
    %v315 = vld [vmem:[#allocation4 + $0xc8] sm:$0xff]
    %v316 = vld [vmem:[#allocation4 + $0xd0] sm:$0xff]
    %v317 = vld [vmem:[#allocation4 + $0xd8] sm:$0xff]
    %v318 = vld [vmem:[#allocation4 + $0xe0] sm:$0xff]
    %v319 = vld [vmem:[#allocation4 + $0xe8] sm:$0xff]
    %v320 = vld [vmem:[#allocation4 + $0xf0] sm:$0xff]
    %v321 = vld [vmem:[#allocation4 + $0xf8] sm:$0xff]
    %v322 = vld [vmem:[#allocation4 + $0x100] sm:$0xff]
    %v323 = vld [vmem:[#allocation4 + $0x108] sm:$0xff]
    %v324 = vld [vmem:[#allocation4 + $0x110] sm:$0xff]
    %v325 = vld [vmem:[#allocation4 + $0x118] sm:$0xff]
    %v326 = vld [vmem:[#allocation4 + $0x120] sm:$0xff]
    %v327 = vld [vmem:[#allocation4 + $0x128] sm:$0xff]
    %v328 = vld [vmem:[#allocation4 + $0x130] sm:$0xff]
    %v329 = vld [vmem:[#allocation4 + $0x138] sm:$0xff]
    %v330 = vld [vmem:[#allocation4 + $0x140] sm:$0xff]
    %v331 = vld [vmem:[#allocation4 + $0x148] sm:$0xff]
    %v332 = vld [vmem:[#allocation4 + $0x150] sm:$0xff]
    %v333 = vld [vmem:[#allocation4 + $0x158] sm:$0xff]
    %v334 = vld [vmem:[#allocation4 + $0x160] sm:$0xff]
    %v335 = vld [vmem:[#allocation4 + $0x168] sm:$0xff]
    %v336 = vld [vmem:[#allocation4 + $0x170] sm:$0xff]
    %v337 = vld [vmem:[#allocation4 + $0x178] sm:$0xff]
    %v338 = vld [vmem:[#allocation4 + $0x180] sm:$0xff]
    %v339 = vld [vmem:[#allocation4 + $0x188] sm:$0xff]
    %v340 = vld [vmem:[#allocation4 + $0x190] sm:$0xff]
    %v341 = vld [vmem:[#allocation4 + $0x198] sm:$0xff]
    %v342 = vld [vmem:[#allocation4 + $0x1a0] sm:$0xff]
    %v343 = vld [vmem:[#allocation4 + $0x1a8] sm:$0xff]
    %v344 = vld [vmem:[#allocation4 + $0x1b0] sm:$0xff]
    %v345 = vld [vmem:[#allocation4 + $0x1b8] sm:$0xff]
    %v346 = vld [vmem:[#allocation4 + $0x1c0] sm:$0xff]
    %v347 = vld [vmem:[#allocation4 + $0x1c8] sm:$0xff]
    %v348 = vld [vmem:[#allocation4 + $0x1d0] sm:$0xff]
    %v349 = vld [vmem:[#allocation4 + $0x1d8] sm:$0xff]
    %v350 = vld [vmem:[#allocation4 + $0x1e0] sm:$0xff]
    %v351 = vld [vmem:[#allocation4 + $0x1e8] sm:$0xff]
    %v352 = vld [vmem:[#allocation4 + $0x1f0] sm:$0xff]
    %v353 = vld [vmem:[#allocation4 + $0x1f8] sm:$0xff]
    %s354 = scalar_lea.vmem [#allocation6], 32
    %v355 = vld [vmem:[%s354] sm:$0xff]
    %v356 = vld [vmem:[%s354 + $0x8] sm:$0xff]
    %v357 = vld [vmem:[%s354 + $0x10] sm:$0xff]
    %v358 = vld [vmem:[%s354 + $0x18] sm:$0xff]
    %359 = vmatprep.subr.mxu0 %v291
    %360 = vmatpush1.msra.mxu0 %v290
    %361 = vmatprep.subr.mxu0 %v295
    %362 = vmatpush1.msra.mxu0 %v294
    %363 = vmatprep.subr.mxu0 %v299
    %364 = vmatpush1.msra.mxu0 %v298
    %365 = vmatprep.subr.mxu0 %v303
    %366 = vmatpush1.msra.mxu0 %v302
    %367 = vmatprep.subr.mxu0 %v307
    %368 = vmatpush1.msra.mxu0 %v306
    %369 = vmatprep.subr.mxu0 %v311
    %370 = vmatpush1.msra.mxu0 %v310
    %371 = vmatprep.subr.mxu0 %v315
    %372 = vmatpush1.msra.mxu0 %v314
    %373 = vmatprep.subr.mxu0 %v319
    %374 = vmatpush1.msra.mxu0 %v318
    %375 = vmatprep.subr.mxu0 %v323
    %376 = vmatpush1.msra.mxu0 %v322
    %377 = vmatprep.subr.mxu0 %v327
    %378 = vmatpush1.msra.mxu0 %v326
    %379 = vmatprep.subr.mxu0 %v331
    %380 = vmatpush1.msra.mxu0 %v330
    %381 = vmatprep.subr.mxu0 %v335
    %382 = vmatpush1.msra.mxu0 %v334
    %383 = vmatprep.subr.mxu0 %v339
    %384 = vmatpush1.msra.mxu0 %v338
    %385 = vmatprep.subr.mxu0 %v343
    %386 = vmatpush1.msra.mxu0 %v342
    %387 = vmatprep.subr.mxu0 %v347
    %388 = vmatpush1.msra.mxu0 %v346
    %389 = vmatprep.subr.mxu0 %v351
    %390 = vmatpush1.msra.mxu0 %v350
    %391 = vmatprep.subr.mxu0 0.0
    %392 = vmatpush1.msra.mxu0 0.0
    %393 = vmatprep.subr.mxu0 0.0
    %394 = vmatpush1.msra.mxu0 0.0
    %395 = vmatprep.subr.mxu0 0.0
    %396 = vmatpush1.msra.mxu0 0.0
    %397 = vmatprep.subr.mxu0 0.0
    %398 = vmatpush1.msra.mxu0 0.0
    %399 = vmatprep.subr.mxu0 0.0
    %400 = vmatpush1.msra.mxu0 0.0
    %401 = vmatprep.subr.mxu0 0.0
    %402 = vmatpush1.msra.mxu0 0.0
    %403 = vmatprep.subr.mxu0 0.0
    %404 = vmatpush1.msra.mxu0 0.0
    %405 = vmatprep.subr.mxu0 0.0
    %406 = vmatpush1.msra.mxu0 0.0
    %407 = vmatprep.subr.mxu0 0.0
    %408 = vmatpush1.msra.mxu0 0.0
    %409 = vmatprep.subr.mxu0 0.0
    %410 = vmatpush1.msra.mxu0 0.0
    %411 = vmatprep.subr.mxu0 0.0
    %412 = vmatpush1.msra.mxu0 0.0
    %413 = vmatprep.subr.mxu0 0.0
    %414 = vmatpush1.msra.mxu0 0.0
    %415 = vmatprep.subr.mxu0 0.0
    %416 = vmatpush1.msra.mxu0 0.0
    %417 = vmatprep.subr.mxu0 0.0
    %418 = vmatpush1.msra.mxu0 0.0
    %419 = vmatprep.subr.mxu0 0.0
    %420 = vmatpush1.msra.mxu0 0.0
    %421 = vmatprep.subr.mxu0 0.0
    %422 = vmatpush1.msra.mxu0 0.0
    %423 = vmatprep.mubr.f32.mxu0 0.0
    %424 = vmatmul.mubr.f32.gmra.mrb[0].mxu0 %v288
    %v425 = vpop.f32.mrb[0].mxu0
    %v426 = vadd.f32 0.0, %v425
    %v427 = vpop.f32.mrb[0].mxu0
    %v428 = vadd.f32 0.0, %v427
    %429 = vdwg.mxu0
    %430 = vmatprep.subr.mxu0 %v293
    %431 = vmatpush1.msra.mxu0 %v292
    %432 = vmatprep.subr.mxu0 %v297
    %433 = vmatpush1.msra.mxu0 %v296
    %434 = vmatprep.subr.mxu0 %v301
    %435 = vmatpush1.msra.mxu0 %v300
    %436 = vmatprep.subr.mxu0 %v305
    %437 = vmatpush1.msra.mxu0 %v304
    %438 = vmatprep.subr.mxu0 %v309
    %439 = vmatpush1.msra.mxu0 %v308
    %440 = vmatprep.subr.mxu0 %v313
    %441 = vmatpush1.msra.mxu0 %v312
    %442 = vmatprep.subr.mxu0 %v317
    %443 = vmatpush1.msra.mxu0 %v316
    %444 = vmatprep.subr.mxu0 %v321
    %445 = vmatpush1.msra.mxu0 %v320
    %446 = vmatprep.subr.mxu0 %v325
    %447 = vmatpush1.msra.mxu0 %v324
    %448 = vmatprep.subr.mxu0 %v329
    %449 = vmatpush1.msra.mxu0 %v328
    %450 = vmatprep.subr.mxu0 %v333
    %451 = vmatpush1.msra.mxu0 %v332
    %452 = vmatprep.subr.mxu0 %v337
    %453 = vmatpush1.msra.mxu0 %v336
    %454 = vmatprep.subr.mxu0 %v341
    %455 = vmatpush1.msra.mxu0 %v340
    %456 = vmatprep.subr.mxu0 %v345
    %457 = vmatpush1.msra.mxu0 %v344
    %458 = vmatprep.subr.mxu0 %v349
    %459 = vmatpush1.msra.mxu0 %v348
    %460 = vmatprep.subr.mxu0 %v353
    %461 = vmatpush1.msra.mxu0 %v352
    %462 = vmatprep.subr.mxu0 0.0
    %463 = vmatpush1.msra.mxu0 0.0
    %464 = vmatprep.subr.mxu0 0.0
    %465 = vmatpush1.msra.mxu0 0.0
    %466 = vmatprep.subr.mxu0 0.0
    %467 = vmatpush1.msra.mxu0 0.0
    %468 = vmatprep.subr.mxu0 0.0
    %469 = vmatpush1.msra.mxu0 0.0
    %470 = vmatprep.subr.mxu0 0.0
    %471 = vmatpush1.msra.mxu0 0.0
    %472 = vmatprep.subr.mxu0 0.0
    %473 = vmatpush1.msra.mxu0 0.0
    %474 = vmatprep.subr.mxu0 0.0
    %475 = vmatpush1.msra.mxu0 0.0
    %476 = vmatprep.subr.mxu0 0.0
    %477 = vmatpush1.msra.mxu0 0.0
    %478 = vmatprep.subr.mxu0 0.0
    %479 = vmatpush1.msra.mxu0 0.0
    %480 = vmatprep.subr.mxu0 0.0
    %481 = vmatpush1.msra.mxu0 0.0
    %482 = vmatprep.subr.mxu0 0.0
    %483 = vmatpush1.msra.mxu0 0.0
    %484 = vmatprep.subr.mxu0 0.0
    %485 = vmatpush1.msra.mxu0 0.0
    %486 = vmatprep.subr.mxu0 0.0
    %487 = vmatpush1.msra.mxu0 0.0
    %488 = vmatprep.subr.mxu0 0.0
    %489 = vmatpush1.msra.mxu0 0.0
    %490 = vmatprep.subr.mxu0 0.0
    %491 = vmatpush1.msra.mxu0 0.0
    %492 = vmatprep.subr.mxu0 0.0
    %493 = vmatpush1.msra.mxu0 0.0
    %494 = vmatprep.mubr.f32.mxu0 0.0
    %495 = vmatmul.mubr.f32.gmra.mrb[0].mxu0 %v288
    %v496 = vpop.f32.mrb[0].mxu0
    %v497 = vadd.f32 0.0, %v496
    %v498 = vpop.f32.mrb[0].mxu0
    %v499 = vadd.f32 0.0, %v498
    %500 = vdwg.mxu0
    %v501 = vadd.f32 %v355, %v426
    %v502 = vadd.f32 %v356, %v428
    %v503 = vadd.f32 %v357, %v497
    %v504 = vadd.f32 %v358, %v499
    %v505 = vxor.u32 %v501, 2147483648
    %v506 = vmul.f32 %v505, 1.442695
    %v507 = vpow.pop %v506
    %v508 = vadd.f32 %v507, 1.0
    %v509 = vrcp.pop %v508
    %v510 = vmul.f32 1.0, %v509
    %v511 = vxor.u32 %v502, 2147483648
    %v512 = vmul.f32 %v511, 1.442695
    %v513 = vpow.pop %v512
    %v514 = vadd.f32 %v513, 1.0
    %v515 = vrcp.pop %v514
    %v516 = vmul.f32 1.0, %v515
    %v517 = vtanh.pop %v503
    %v518 = vxor.u32 %v504, 2147483648
    %v519 = vmul.f32 %v518, 1.442695
    %v520 = vpow.pop %v519
    %v521 = vadd.f32 %v520, 1.0
    %v522 = vrcp.pop %v521
    %v523 = vmul.f32 1.0, %v522
    %v524 = vmul.f32 %v516, %v286
    %v525 = vmul.f32 %v510, %v517
    %v526 = vadd.f32 %v524, %v525
    %v527 = vtanh.pop %v526
    %v528 = vmul.f32 %v523, %v527
    %s529 = scalar_lea.vmem [#allocation9], 8
    %530 = vst [vmem:[%s529] sm:$0xff] %v528
    %v531 = vld [vmem:[#allocation4] sm:$0xff]
    %v532 = vld [vmem:[#allocation4 + $0x8] sm:$0xff]
    %v533 = vld [vmem:[#allocation4 + $0x10] sm:$0xff]
    %v534 = vld [vmem:[#allocation4 + $0x18] sm:$0xff]
    %v535 = vld [vmem:[#allocation4 + $0x20] sm:$0xff]
    %v536 = vld [vmem:[#allocation4 + $0x28] sm:$0xff]
    %v537 = vld [vmem:[#allocation4 + $0x30] sm:$0xff]
    %v538 = vld [vmem:[#allocation4 + $0x38] sm:$0xff]
    %v539 = vld [vmem:[#allocation4 + $0x40] sm:$0xff]
    %v540 = vld [vmem:[#allocation4 + $0x48] sm:$0xff]
    %v541 = vld [vmem:[#allocation4 + $0x50] sm:$0xff]
    %v542 = vld [vmem:[#allocation4 + $0x58] sm:$0xff]
    %v543 = vld [vmem:[#allocation4 + $0x60] sm:$0xff]
    %v544 = vld [vmem:[#allocation4 + $0x68] sm:$0xff]
    %v545 = vld [vmem:[#allocation4 + $0x70] sm:$0xff]
    %v546 = vld [vmem:[#allocation4 + $0x78] sm:$0xff]
    %v547 = vld [vmem:[#allocation4 + $0x80] sm:$0xff]
    %v548 = vld [vmem:[#allocation4 + $0x88] sm:$0xff]
    %v549 = vld [vmem:[#allocation4 + $0x90] sm:$0xff]
    %v550 = vld [vmem:[#allocation4 + $0x98] sm:$0xff]
    %v551 = vld [vmem:[#allocation4 + $0xa0] sm:$0xff]
    %v552 = vld [vmem:[#allocation4 + $0xa8] sm:$0xff]
    %v553 = vld [vmem:[#allocation4 + $0xb0] sm:$0xff]
    %v554 = vld [vmem:[#allocation4 + $0xb8] sm:$0xff]
    %v555 = vld [vmem:[#allocation4 + $0xc0] sm:$0xff]
    %v556 = vld [vmem:[#allocation4 + $0xc8] sm:$0xff]
    %v557 = vld [vmem:[#allocation4 + $0xd0] sm:$0xff]
    %v558 = vld [vmem:[#allocation4 + $0xd8] sm:$0xff]
    %v559 = vld [vmem:[#allocation4 + $0xe0] sm:$0xff]
    %v560 = vld [vmem:[#allocation4 + $0xe8] sm:$0xff]
    %v561 = vld [vmem:[#allocation4 + $0xf0] sm:$0xff]
    %v562 = vld [vmem:[#allocation4 + $0xf8] sm:$0xff]
    %v563 = vld [vmem:[#allocation4 + $0x100] sm:$0xff]
    %v564 = vld [vmem:[#allocation4 + $0x108] sm:$0xff]
    %v565 = vld [vmem:[#allocation4 + $0x110] sm:$0xff]
    %v566 = vld [vmem:[#allocation4 + $0x118] sm:$0xff]
    %v567 = vld [vmem:[#allocation4 + $0x120] sm:$0xff]
    %v568 = vld [vmem:[#allocation4 + $0x128] sm:$0xff]
    %v569 = vld [vmem:[#allocation4 + $0x130] sm:$0xff]
    %v570 = vld [vmem:[#allocation4 + $0x138] sm:$0xff]
    %v571 = vld [vmem:[#allocation4 + $0x140] sm:$0xff]
    %v572 = vld [vmem:[#allocation4 + $0x148] sm:$0xff]
    %v573 = vld [vmem:[#allocation4 + $0x150] sm:$0xff]
    %v574 = vld [vmem:[#allocation4 + $0x158] sm:$0xff]
    %v575 = vld [vmem:[#allocation4 + $0x160] sm:$0xff]
    %v576 = vld [vmem:[#allocation4 + $0x168] sm:$0xff]
    %v577 = vld [vmem:[#allocation4 + $0x170] sm:$0xff]
    %v578 = vld [vmem:[#allocation4 + $0x178] sm:$0xff]
    %v579 = vld [vmem:[#allocation4 + $0x180] sm:$0xff]
    %v580 = vld [vmem:[#allocation4 + $0x188] sm:$0xff]
    %v581 = vld [vmem:[#allocation4 + $0x190] sm:$0xff]
    %v582 = vld [vmem:[#allocation4 + $0x198] sm:$0xff]
    %v583 = vld [vmem:[#allocation4 + $0x1a0] sm:$0xff]
    %v584 = vld [vmem:[#allocation4 + $0x1a8] sm:$0xff]
    %v585 = vld [vmem:[#allocation4 + $0x1b0] sm:$0xff]
    %v586 = vld [vmem:[#allocation4 + $0x1b8] sm:$0xff]
    %v587 = vld [vmem:[#allocation4 + $0x1c0] sm:$0xff]
    %v588 = vld [vmem:[#allocation4 + $0x1c8] sm:$0xff]
    %v589 = vld [vmem:[#allocation4 + $0x1d0] sm:$0xff]
    %v590 = vld [vmem:[#allocation4 + $0x1d8] sm:$0xff]
    %v591 = vld [vmem:[#allocation4 + $0x1e0] sm:$0xff]
    %v592 = vld [vmem:[#allocation4 + $0x1e8] sm:$0xff]
    %v593 = vld [vmem:[#allocation4 + $0x1f0] sm:$0xff]
    %v594 = vld [vmem:[#allocation4 + $0x1f8] sm:$0xff]
    %s595 = scalar_lea.vmem [#allocation6], 64
    %v596 = vld [vmem:[%s595] sm:$0xff]
    %v597 = vld [vmem:[%s595 + $0x8] sm:$0xff]
    %v598 = vld [vmem:[%s595 + $0x10] sm:$0xff]
    %v599 = vld [vmem:[%s595 + $0x18] sm:$0xff]
    %600 = vmatprep.subr.mxu0 %v532
    %601 = vmatpush1.msra.mxu0 %v531
    %602 = vmatprep.subr.mxu0 %v536
    %603 = vmatpush1.msra.mxu0 %v535
    %604 = vmatprep.subr.mxu0 %v540
    %605 = vmatpush1.msra.mxu0 %v539
    %606 = vmatprep.subr.mxu0 %v544
    %607 = vmatpush1.msra.mxu0 %v543
    %608 = vmatprep.subr.mxu0 %v548
    %609 = vmatpush1.msra.mxu0 %v547
    %610 = vmatprep.subr.mxu0 %v552
    %611 = vmatpush1.msra.mxu0 %v551
    %612 = vmatprep.subr.mxu0 %v556
    %613 = vmatpush1.msra.mxu0 %v555
    %614 = vmatprep.subr.mxu0 %v560
    %615 = vmatpush1.msra.mxu0 %v559
    %616 = vmatprep.subr.mxu0 %v564
    %617 = vmatpush1.msra.mxu0 %v563
    %618 = vmatprep.subr.mxu0 %v568
    %619 = vmatpush1.msra.mxu0 %v567
    %620 = vmatprep.subr.mxu0 %v572
    %621 = vmatpush1.msra.mxu0 %v571
    %622 = vmatprep.subr.mxu0 %v576
    %623 = vmatpush1.msra.mxu0 %v575
    %624 = vmatprep.subr.mxu0 %v580
    %625 = vmatpush1.msra.mxu0 %v579
    %626 = vmatprep.subr.mxu0 %v584
    %627 = vmatpush1.msra.mxu0 %v583
    %628 = vmatprep.subr.mxu0 %v588
    %629 = vmatpush1.msra.mxu0 %v587
    %630 = vmatprep.subr.mxu0 %v592
    %631 = vmatpush1.msra.mxu0 %v591
    %632 = vmatprep.subr.mxu0 0.0
    %633 = vmatpush1.msra.mxu0 0.0
    %634 = vmatprep.subr.mxu0 0.0
    %635 = vmatpush1.msra.mxu0 0.0
    %636 = vmatprep.subr.mxu0 0.0
    %637 = vmatpush1.msra.mxu0 0.0
    %638 = vmatprep.subr.mxu0 0.0
    %639 = vmatpush1.msra.mxu0 0.0
    %640 = vmatprep.subr.mxu0 0.0
    %641 = vmatpush1.msra.mxu0 0.0
    %642 = vmatprep.subr.mxu0 0.0
    %643 = vmatpush1.msra.mxu0 0.0
    %644 = vmatprep.subr.mxu0 0.0
    %645 = vmatpush1.msra.mxu0 0.0
    %646 = vmatprep.subr.mxu0 0.0
    %647 = vmatpush1.msra.mxu0 0.0
    %648 = vmatprep.subr.mxu0 0.0
    %649 = vmatpush1.msra.mxu0 0.0
    %650 = vmatprep.subr.mxu0 0.0
    %651 = vmatpush1.msra.mxu0 0.0
    %652 = vmatprep.subr.mxu0 0.0
    %653 = vmatpush1.msra.mxu0 0.0
    %654 = vmatprep.subr.mxu0 0.0
    %655 = vmatpush1.msra.mxu0 0.0
    %656 = vmatprep.subr.mxu0 0.0
    %657 = vmatpush1.msra.mxu0 0.0
    %658 = vmatprep.subr.mxu0 0.0
    %659 = vmatpush1.msra.mxu0 0.0
    %660 = vmatprep.subr.mxu0 0.0
    %661 = vmatpush1.msra.mxu0 0.0
    %662 = vmatprep.subr.mxu0 0.0
    %663 = vmatpush1.msra.mxu0 0.0
    %664 = vmatprep.mubr.f32.mxu0 0.0
    %665 = vmatmul.mubr.f32.gmra.mrb[0].mxu0 %v528
    %v666 = vpop.f32.mrb[0].mxu0
    %v667 = vadd.f32 0.0, %v666
    %v668 = vpop.f32.mrb[0].mxu0
    %v669 = vadd.f32 0.0, %v668
    %670 = vdwg.mxu0
    %671 = vmatprep.subr.mxu0 %v534
    %672 = vmatpush1.msra.mxu0 %v533
    %673 = vmatprep.subr.mxu0 %v538
    %674 = vmatpush1.msra.mxu0 %v537
    %675 = vmatprep.subr.mxu0 %v542
    %676 = vmatpush1.msra.mxu0 %v541
    %677 = vmatprep.subr.mxu0 %v546
    %678 = vmatpush1.msra.mxu0 %v545
    %679 = vmatprep.subr.mxu0 %v550
    %680 = vmatpush1.msra.mxu0 %v549
    %681 = vmatprep.subr.mxu0 %v554
    %682 = vmatpush1.msra.mxu0 %v553
    %683 = vmatprep.subr.mxu0 %v558
    %684 = vmatpush1.msra.mxu0 %v557
    %685 = vmatprep.subr.mxu0 %v562
    %686 = vmatpush1.msra.mxu0 %v561
    %687 = vmatprep.subr.mxu0 %v566
    %688 = vmatpush1.msra.mxu0 %v565
    %689 = vmatprep.subr.mxu0 %v570
    %690 = vmatpush1.msra.mxu0 %v569
    %691 = vmatprep.subr.mxu0 %v574
    %692 = vmatpush1.msra.mxu0 %v573
    %693 = vmatprep.subr.mxu0 %v578
    %694 = vmatpush1.msra.mxu0 %v577
    %695 = vmatprep.subr.mxu0 %v582
    %696 = vmatpush1.msra.mxu0 %v581
    %697 = vmatprep.subr.mxu0 %v586
    %698 = vmatpush1.msra.mxu0 %v585
    %699 = vmatprep.subr.mxu0 %v590
    %700 = vmatpush1.msra.mxu0 %v589
    %701 = vmatprep.subr.mxu0 %v594
    %702 = vmatpush1.msra.mxu0 %v593
    %703 = vmatprep.subr.mxu0 0.0
    %704 = vmatpush1.msra.mxu0 0.0
    %705 = vmatprep.subr.mxu0 0.0
    %706 = vmatpush1.msra.mxu0 0.0
    %707 = vmatprep.subr.mxu0 0.0
    %708 = vmatpush1.msra.mxu0 0.0
    %709 = vmatprep.subr.mxu0 0.0
    %710 = vmatpush1.msra.mxu0 0.0
    %711 = vmatprep.subr.mxu0 0.0
    %712 = vmatpush1.msra.mxu0 0.0
    %713 = vmatprep.subr.mxu0 0.0
    %714 = vmatpush1.msra.mxu0 0.0
    %715 = vmatprep.subr.mxu0 0.0
    %716 = vmatpush1.msra.mxu0 0.0
    %717 = vmatprep.subr.mxu0 0.0
    %718 = vmatpush1.msra.mxu0 0.0
    %719 = vmatprep.subr.mxu0 0.0
    %720 = vmatpush1.msra.mxu0 0.0
    %721 = vmatprep.subr.mxu0 0.0
    %722 = vmatpush1.msra.mxu0 0.0
    %723 = vmatprep.subr.mxu0 0.0
    %724 = vmatpush1.msra.mxu0 0.0
    %725 = vmatprep.subr.mxu0 0.0
    %726 = vmatpush1.msra.mxu0 0.0
    %727 = vmatprep.subr.mxu0 0.0
    %728 = vmatpush1.msra.mxu0 0.0
    %729 = vmatprep.subr.mxu0 0.0
    %730 = vmatpush1.msra.mxu0 0.0
    %731 = vmatprep.subr.mxu0 0.0
    %732 = vmatpush1.msra.mxu0 0.0
    %733 = vmatprep.subr.mxu0 0.0
    %734 = vmatpush1.msra.mxu0 0.0
    %735 = vmatprep.mubr.f32.mxu0 0.0
    %736 = vmatmul.mubr.f32.gmra.mrb[0].mxu0 %v528
    %v737 = vpop.f32.mrb[0].mxu0
    %v738 = vadd.f32 0.0, %v737
    %v739 = vpop.f32.mrb[0].mxu0
    %v740 = vadd.f32 0.0, %v739
    %741 = vdwg.mxu0
    %v742 = vadd.f32 %v596, %v667
    %v743 = vadd.f32 %v597, %v669
    %v744 = vadd.f32 %v598, %v738
    %v745 = vadd.f32 %v599, %v740
    %v746 = vxor.u32 %v742, 2147483648
    %v747 = vmul.f32 %v746, 1.442695
    %v748 = vpow.pop %v747
    %v749 = vadd.f32 %v748, 1.0
    %v750 = vrcp.pop %v749
    %v751 = vmul.f32 1.0, %v750
    %v752 = vxor.u32 %v743, 2147483648
    %v753 = vmul.f32 %v752, 1.442695
    %v754 = vpow.pop %v753
    %v755 = vadd.f32 %v754, 1.0
    %v756 = vrcp.pop %v755
    %v757 = vmul.f32 1.0, %v756
    %v758 = vtanh.pop %v744
    %v759 = vxor.u32 %v745, 2147483648
    %v760 = vmul.f32 %v759, 1.442695
    %v761 = vpow.pop %v760
    %v762 = vadd.f32 %v761, 1.0
    %v763 = vrcp.pop %v762
    %v764 = vmul.f32 1.0, %v763
    %v765 = vmul.f32 %v757, %v526
    %v766 = vmul.f32 %v751, %v758
    %v767 = vadd.f32 %v765, %v766
    %v768 = vtanh.pop %v767
    %v769 = vmul.f32 %v764, %v768
    %s770 = scalar_lea.vmem [#allocation9], 16
    %771 = vst [vmem:[%s770] sm:$0xff] %v769
    %v772 = vld [vmem:[#allocation4] sm:$0xff]
    %v773 = vld [vmem:[#allocation4 + $0x8] sm:$0xff]
    %v774 = vld [vmem:[#allocation4 + $0x10] sm:$0xff]
    %v775 = vld [vmem:[#allocation4 + $0x18] sm:$0xff]
    %v776 = vld [vmem:[#allocation4 + $0x20] sm:$0xff]
    %v777 = vld [vmem:[#allocation4 + $0x28] sm:$0xff]
    %v778 = vld [vmem:[#allocation4 + $0x30] sm:$0xff]
    %v779 = vld [vmem:[#allocation4 + $0x38] sm:$0xff]
    %v780 = vld [vmem:[#allocation4 + $0x40] sm:$0xff]
    %v781 = vld [vmem:[#allocation4 + $0x48] sm:$0xff]
    %v782 = vld [vmem:[#allocation4 + $0x50] sm:$0xff]
    %v783 = vld [vmem:[#allocation4 + $0x58] sm:$0xff]
    %v784 = vld [vmem:[#allocation4 + $0x60] sm:$0xff]
    %v785 = vld [vmem:[#allocation4 + $0x68] sm:$0xff]
    %v786 = vld [vmem:[#allocation4 + $0x70] sm:$0xff]
    %v787 = vld [vmem:[#allocation4 + $0x78] sm:$0xff]
    %v788 = vld [vmem:[#allocation4 + $0x80] sm:$0xff]
    %v789 = vld [vmem:[#allocation4 + $0x88] sm:$0xff]
    %v790 = vld [vmem:[#allocation4 + $0x90] sm:$0xff]
    %v791 = vld [vmem:[#allocation4 + $0x98] sm:$0xff]
    %v792 = vld [vmem:[#allocation4 + $0xa0] sm:$0xff]
    %v793 = vld [vmem:[#allocation4 + $0xa8] sm:$0xff]
    %v794 = vld [vmem:[#allocation4 + $0xb0] sm:$0xff]
    %v795 = vld [vmem:[#allocation4 + $0xb8] sm:$0xff]
    %v796 = vld [vmem:[#allocation4 + $0xc0] sm:$0xff]
    %v797 = vld [vmem:[#allocation4 + $0xc8] sm:$0xff]
    %v798 = vld [vmem:[#allocation4 + $0xd0] sm:$0xff]
    %v799 = vld [vmem:[#allocation4 + $0xd8] sm:$0xff]
    %v800 = vld [vmem:[#allocation4 + $0xe0] sm:$0xff]
    %v801 = vld [vmem:[#allocation4 + $0xe8] sm:$0xff]
    %v802 = vld [vmem:[#allocation4 + $0xf0] sm:$0xff]
    %v803 = vld [vmem:[#allocation4 + $0xf8] sm:$0xff]
    %v804 = vld [vmem:[#allocation4 + $0x100] sm:$0xff]
    %v805 = vld [vmem:[#allocation4 + $0x108] sm:$0xff]
    %v806 = vld [vmem:[#allocation4 + $0x110] sm:$0xff]
    %v807 = vld [vmem:[#allocation4 + $0x118] sm:$0xff]
    %v808 = vld [vmem:[#allocation4 + $0x120] sm:$0xff]
    %v809 = vld [vmem:[#allocation4 + $0x128] sm:$0xff]
    %v810 = vld [vmem:[#allocation4 + $0x130] sm:$0xff]
    %v811 = vld [vmem:[#allocation4 + $0x138] sm:$0xff]
    %v812 = vld [vmem:[#allocation4 + $0x140] sm:$0xff]
    %v813 = vld [vmem:[#allocation4 + $0x148] sm:$0xff]
    %v814 = vld [vmem:[#allocation4 + $0x150] sm:$0xff]
    %v815 = vld [vmem:[#allocation4 + $0x158] sm:$0xff]
    %v816 = vld [vmem:[#allocation4 + $0x160] sm:$0xff]
    %v817 = vld [vmem:[#allocation4 + $0x168] sm:$0xff]
    %v818 = vld [vmem:[#allocation4 + $0x170] sm:$0xff]
    %v819 = vld [vmem:[#allocation4 + $0x178] sm:$0xff]
    %v820 = vld [vmem:[#allocation4 + $0x180] sm:$0xff]
    %v821 = vld [vmem:[#allocation4 + $0x188] sm:$0xff]
    %v822 = vld [vmem:[#allocation4 + $0x190] sm:$0xff]
    %v823 = vld [vmem:[#allocation4 + $0x198] sm:$0xff]
    %v824 = vld [vmem:[#allocation4 + $0x1a0] sm:$0xff]
    %v825 = vld [vmem:[#allocation4 + $0x1a8] sm:$0xff]
    %v826 = vld [vmem:[#allocation4 + $0x1b0] sm:$0xff]
    %v827 = vld [vmem:[#allocation4 + $0x1b8] sm:$0xff]
    %v828 = vld [vmem:[#allocation4 + $0x1c0] sm:$0xff]
    %v829 = vld [vmem:[#allocation4 + $0x1c8] sm:$0xff]
    %v830 = vld [vmem:[#allocation4 + $0x1d0] sm:$0xff]
    %v831 = vld [vmem:[#allocation4 + $0x1d8] sm:$0xff]
    %v832 = vld [vmem:[#allocation4 + $0x1e0] sm:$0xff]
    %v833 = vld [vmem:[#allocation4 + $0x1e8] sm:$0xff]
    %v834 = vld [vmem:[#allocation4 + $0x1f0] sm:$0xff]
    %v835 = vld [vmem:[#allocation4 + $0x1f8] sm:$0xff]
    %s836 = scalar_lea.vmem [#allocation6], 96
    %v837 = vld [vmem:[%s836] sm:$0xff]
    %v838 = vld [vmem:[%s836 + $0x8] sm:$0xff]
    %v839 = vld [vmem:[%s836 + $0x10] sm:$0xff]
    %v840 = vld [vmem:[%s836 + $0x18] sm:$0xff]
    %841 = vmatprep.subr.mxu0 %v773
    %842 = vmatpush1.msra.mxu0 %v772
    %843 = vmatprep.subr.mxu0 %v777
    %844 = vmatpush1.msra.mxu0 %v776
    %845 = vmatprep.subr.mxu0 %v781
    %846 = vmatpush1.msra.mxu0 %v780
    %847 = vmatprep.subr.mxu0 %v785
    %848 = vmatpush1.msra.mxu0 %v784
    %849 = vmatprep.subr.mxu0 %v789
    %850 = vmatpush1.msra.mxu0 %v788
    %851 = vmatprep.subr.mxu0 %v793
    %852 = vmatpush1.msra.mxu0 %v792
    %853 = vmatprep.subr.mxu0 %v797
    %854 = vmatpush1.msra.mxu0 %v796
    %855 = vmatprep.subr.mxu0 %v801
    %856 = vmatpush1.msra.mxu0 %v800
    %857 = vmatprep.subr.mxu0 %v805
    %858 = vmatpush1.msra.mxu0 %v804
    %859 = vmatprep.subr.mxu0 %v809
    %860 = vmatpush1.msra.mxu0 %v808
    %861 = vmatprep.subr.mxu0 %v813
    %862 = vmatpush1.msra.mxu0 %v812
    %863 = vmatprep.subr.mxu0 %v817
    %864 = vmatpush1.msra.mxu0 %v816
    %865 = vmatprep.subr.mxu0 %v821
    %866 = vmatpush1.msra.mxu0 %v820
    %867 = vmatprep.subr.mxu0 %v825
    %868 = vmatpush1.msra.mxu0 %v824
    %869 = vmatprep.subr.mxu0 %v829
    %870 = vmatpush1.msra.mxu0 %v828
    %871 = vmatprep.subr.mxu0 %v833
    %872 = vmatpush1.msra.mxu0 %v832
    %873 = vmatprep.subr.mxu0 0.0
    %874 = vmatpush1.msra.mxu0 0.0
    %875 = vmatprep.subr.mxu0 0.0
    %876 = vmatpush1.msra.mxu0 0.0
    %877 = vmatprep.subr.mxu0 0.0
    %878 = vmatpush1.msra.mxu0 0.0
    %879 = vmatprep.subr.mxu0 0.0
    %880 = vmatpush1.msra.mxu0 0.0
    %881 = vmatprep.subr.mxu0 0.0
    %882 = vmatpush1.msra.mxu0 0.0
    %883 = vmatprep.subr.mxu0 0.0
    %884 = vmatpush1.msra.mxu0 0.0
    %885 = vmatprep.subr.mxu0 0.0
    %886 = vmatpush1.msra.mxu0 0.0
    %887 = vmatprep.subr.mxu0 0.0
    %888 = vmatpush1.msra.mxu0 0.0
    %889 = vmatprep.subr.mxu0 0.0
    %890 = vmatpush1.msra.mxu0 0.0
    %891 = vmatprep.subr.mxu0 0.0
    %892 = vmatpush1.msra.mxu0 0.0
    %893 = vmatprep.subr.mxu0 0.0
    %894 = vmatpush1.msra.mxu0 0.0
    %895 = vmatprep.subr.mxu0 0.0
    %896 = vmatpush1.msra.mxu0 0.0
    %897 = vmatprep.subr.mxu0 0.0
    %898 = vmatpush1.msra.mxu0 0.0
    %899 = vmatprep.subr.mxu0 0.0
    %900 = vmatpush1.msra.mxu0 0.0
    %901 = vmatprep.subr.mxu0 0.0
    %902 = vmatpush1.msra.mxu0 0.0
    %903 = vmatprep.subr.mxu0 0.0
    %904 = vmatpush1.msra.mxu0 0.0
    %905 = vmatprep.mubr.f32.mxu0 0.0
    %906 = vmatmul.mubr.f32.gmra.mrb[0].mxu0 %v769
    %v907 = vpop.f32.mrb[0].mxu0
    %v908 = vadd.f32 0.0, %v907
    %v909 = vpop.f32.mrb[0].mxu0
    %v910 = vadd.f32 0.0, %v909
    %911 = vdwg.mxu0
    %912 = vmatprep.subr.mxu0 %v775
    %913 = vmatpush1.msra.mxu0 %v774
    %914 = vmatprep.subr.mxu0 %v779
    %915 = vmatpush1.msra.mxu0 %v778
    %916 = vmatprep.subr.mxu0 %v783
    %917 = vmatpush1.msra.mxu0 %v782
    %918 = vmatprep.subr.mxu0 %v787
    %919 = vmatpush1.msra.mxu0 %v786
    %920 = vmatprep.subr.mxu0 %v791
    %921 = vmatpush1.msra.mxu0 %v790
    %922 = vmatprep.subr.mxu0 %v795
    %923 = vmatpush1.msra.mxu0 %v794
    %924 = vmatprep.subr.mxu0 %v799
    %925 = vmatpush1.msra.mxu0 %v798
    %926 = vmatprep.subr.mxu0 %v803
    %927 = vmatpush1.msra.mxu0 %v802
    %928 = vmatprep.subr.mxu0 %v807
    %929 = vmatpush1.msra.mxu0 %v806
    %930 = vmatprep.subr.mxu0 %v811
    %931 = vmatpush1.msra.mxu0 %v810
    %932 = vmatprep.subr.mxu0 %v815
    %933 = vmatpush1.msra.mxu0 %v814
    %934 = vmatprep.subr.mxu0 %v819
    %935 = vmatpush1.msra.mxu0 %v818
    %936 = vmatprep.subr.mxu0 %v823
    %937 = vmatpush1.msra.mxu0 %v822
    %938 = vmatprep.subr.mxu0 %v827
    %939 = vmatpush1.msra.mxu0 %v826
    %940 = vmatprep.subr.mxu0 %v831
    %941 = vmatpush1.msra.mxu0 %v830
    %942 = vmatprep.subr.mxu0 %v835
    %943 = vmatpush1.msra.mxu0 %v834
    %944 = vmatprep.subr.mxu0 0.0
    %945 = vmatpush1.msra.mxu0 0.0
    %946 = vmatprep.subr.mxu0 0.0
    %947 = vmatpush1.msra.mxu0 0.0
    %948 = vmatprep.subr.mxu0 0.0
    %949 = vmatpush1.msra.mxu0 0.0
    %950 = vmatprep.subr.mxu0 0.0
    %951 = vmatpush1.msra.mxu0 0.0
    %952 = vmatprep.subr.mxu0 0.0
    %953 = vmatpush1.msra.mxu0 0.0
    %954 = vmatprep.subr.mxu0 0.0
    %955 = vmatpush1.msra.mxu0 0.0
    %956 = vmatprep.subr.mxu0 0.0
    %957 = vmatpush1.msra.mxu0 0.0
    %958 = vmatprep.subr.mxu0 0.0
    %959 = vmatpush1.msra.mxu0 0.0
    %960 = vmatprep.subr.mxu0 0.0
    %961 = vmatpush1.msra.mxu0 0.0
    %962 = vmatprep.subr.mxu0 0.0
    %963 = vmatpush1.msra.mxu0 0.0
    %964 = vmatprep.subr.mxu0 0.0
    %965 = vmatpush1.msra.mxu0 0.0
    %966 = vmatprep.subr.mxu0 0.0
    %967 = vmatpush1.msra.mxu0 0.0
    %968 = vmatprep.subr.mxu0 0.0
    %969 = vmatpush1.msra.mxu0 0.0
    %970 = vmatprep.subr.mxu0 0.0
    %971 = vmatpush1.msra.mxu0 0.0
    %972 = vmatprep.subr.mxu0 0.0
    %973 = vmatpush1.msra.mxu0 0.0
    %974 = vmatprep.subr.mxu0 0.0
    %975 = vmatpush1.msra.mxu0 0.0
    %976 = vmatprep.mubr.f32.mxu0 0.0
    %977 = vmatmul.mubr.f32.gmra.mrb[0].mxu0 %v769
    %v978 = vpop.f32.mrb[0].mxu0
    %v979 = vadd.f32 0.0, %v978
    %v980 = vpop.f32.mrb[0].mxu0
    %v981 = vadd.f32 0.0, %v980
    %982 = vdwg.mxu0
    %v983 = vadd.f32 %v837, %v908
    %v984 = vadd.f32 %v838, %v910
    %v985 = vadd.f32 %v839, %v979
    %v986 = vadd.f32 %v840, %v981
    %v987 = vxor.u32 %v983, 2147483648
    %v988 = vmul.f32 %v987, 1.442695
    %v989 = vpow.pop %v988
    %v990 = vadd.f32 %v989, 1.0
    %v991 = vrcp.pop %v990
    %v992 = vmul.f32 1.0, %v991
    %v993 = vxor.u32 %v984, 2147483648
    %v994 = vmul.f32 %v993, 1.442695
    %v995 = vpow.pop %v994
    %v996 = vadd.f32 %v995, 1.0
    %v997 = vrcp.pop %v996
    %v998 = vmul.f32 1.0, %v997
    %v999 = vtanh.pop %v985
    %v1000 = vxor.u32 %v986, 2147483648
    %v1001 = vmul.f32 %v1000, 1.442695
    %v1002 = vpow.pop %v1001
    %v1003 = vadd.f32 %v1002, 1.0
    %v1004 = vrcp.pop %v1003
    %v1005 = vmul.f32 1.0, %v1004
    %v1006 = vmul.f32 %v998, %v767
    %v1007 = vmul.f32 %v992, %v999
    %v1008 = vadd.f32 %v1006, %v1007
    %v1009 = vtanh.pop %v1008
    %v1010 = vmul.f32 %v1005, %v1009
    %s1011 = scalar_lea.vmem [#allocation9], 24
    %1012 = vst [vmem:[%s1011] sm:$0xff] %v1010
    %v1013 = vld [vmem:[#allocation4] sm:$0xff]
    %v1014 = vld [vmem:[#allocation4 + $0x8] sm:$0xff]
    %v1015 = vld [vmem:[#allocation4 + $0x10] sm:$0xff]
    %v1016 = vld [vmem:[#allocation4 + $0x18] sm:$0xff]
    %v1017 = vld [vmem:[#allocation4 + $0x20] sm:$0xff]
    %v1018 = vld [vmem:[#allocation4 + $0x28] sm:$0xff]
    %v1019 = vld [vmem:[#allocation4 + $0x30] sm:$0xff]
    %v1020 = vld [vmem:[#allocation4 + $0x38] sm:$0xff]
    %v1021 = vld [vmem:[#allocation4 + $0x40] sm:$0xff]
    %v1022 = vld [vmem:[#allocation4 + $0x48] sm:$0xff]
    %v1023 = vld [vmem:[#allocation4 + $0x50] sm:$0xff]
    %v1024 = vld [vmem:[#allocation4 + $0x58] sm:$0xff]
    %v1025 = vld [vmem:[#allocation4 + $0x60] sm:$0xff]
    %v1026 = vld [vmem:[#allocation4 + $0x68] sm:$0xff]
    %v1027 = vld [vmem:[#allocation4 + $0x70] sm:$0xff]
    %v1028 = vld [vmem:[#allocation4 + $0x78] sm:$0xff]
    %v1029 = vld [vmem:[#allocation4 + $0x80] sm:$0xff]
    %v1030 = vld [vmem:[#allocation4 + $0x88] sm:$0xff]
    %v1031 = vld [vmem:[#allocation4 + $0x90] sm:$0xff]
    %v1032 = vld [vmem:[#allocation4 + $0x98] sm:$0xff]
    %v1033 = vld [vmem:[#allocation4 + $0xa0] sm:$0xff]
    %v1034 = vld [vmem:[#allocation4 + $0xa8] sm:$0xff]
    %v1035 = vld [vmem:[#allocation4 + $0xb0] sm:$0xff]
    %v1036 = vld [vmem:[#allocation4 + $0xb8] sm:$0xff]
    %v1037 = vld [vmem:[#allocation4 + $0xc0] sm:$0xff]
    %v1038 = vld [vmem:[#allocation4 + $0xc8] sm:$0xff]
    %v1039 = vld [vmem:[#allocation4 + $0xd0] sm:$0xff]
    %v1040 = vld [vmem:[#allocation4 + $0xd8] sm:$0xff]
    %v1041 = vld [vmem:[#allocation4 + $0xe0] sm:$0xff]
    %v1042 = vld [vmem:[#allocation4 + $0xe8] sm:$0xff]
    %v1043 = vld [vmem:[#allocation4 + $0xf0] sm:$0xff]
    %v1044 = vld [vmem:[#allocation4 + $0xf8] sm:$0xff]
    %v1045 = vld [vmem:[#allocation4 + $0x100] sm:$0xff]
    %v1046 = vld [vmem:[#allocation4 + $0x108] sm:$0xff]
    %v1047 = vld [vmem:[#allocation4 + $0x110] sm:$0xff]
    %v1048 = vld [vmem:[#allocation4 + $0x118] sm:$0xff]
    %v1049 = vld [vmem:[#allocation4 + $0x120] sm:$0xff]
    %v1050 = vld [vmem:[#allocation4 + $0x128] sm:$0xff]
    %v1051 = vld [vmem:[#allocation4 + $0x130] sm:$0xff]
    %v1052 = vld [vmem:[#allocation4 + $0x138] sm:$0xff]
    %v1053 = vld [vmem:[#allocation4 + $0x140] sm:$0xff]
    %v1054 = vld [vmem:[#allocation4 + $0x148] sm:$0xff]
    %v1055 = vld [vmem:[#allocation4 + $0x150] sm:$0xff]
    %v1056 = vld [vmem:[#allocation4 + $0x158] sm:$0xff]
    %v1057 = vld [vmem:[#allocation4 + $0x160] sm:$0xff]
    %v1058 = vld [vmem:[#allocation4 + $0x168] sm:$0xff]
    %v1059 = vld [vmem:[#allocation4 + $0x170] sm:$0xff]
    %v1060 = vld [vmem:[#allocation4 + $0x178] sm:$0xff]
    %v1061 = vld [vmem:[#allocation4 + $0x180] sm:$0xff]
    %v1062 = vld [vmem:[#allocation4 + $0x188] sm:$0xff]
    %v1063 = vld [vmem:[#allocation4 + $0x190] sm:$0xff]
    %v1064 = vld [vmem:[#allocation4 + $0x198] sm:$0xff]
    %v1065 = vld [vmem:[#allocation4 + $0x1a0] sm:$0xff]
    %v1066 = vld [vmem:[#allocation4 + $0x1a8] sm:$0xff]
    %v1067 = vld [vmem:[#allocation4 + $0x1b0] sm:$0xff]
    %v1068 = vld [vmem:[#allocation4 + $0x1b8] sm:$0xff]
    %v1069 = vld [vmem:[#allocation4 + $0x1c0] sm:$0xff]
    %v1070 = vld [vmem:[#allocation4 + $0x1c8] sm:$0xff]
    %v1071 = vld [vmem:[#allocation4 + $0x1d0] sm:$0xff]
    %v1072 = vld [vmem:[#allocation4 + $0x1d8] sm:$0xff]
    %v1073 = vld [vmem:[#allocation4 + $0x1e0] sm:$0xff]
    %v1074 = vld [vmem:[#allocation4 + $0x1e8] sm:$0xff]
    %v1075 = vld [vmem:[#allocation4 + $0x1f0] sm:$0xff]
    %v1076 = vld [vmem:[#allocation4 + $0x1f8] sm:$0xff]
    %s1077 = scalar_lea.vmem [#allocation6], 128
    %v1078 = vld [vmem:[%s1077] sm:$0xff]
    %v1079 = vld [vmem:[%s1077 + $0x8] sm:$0xff]
    %v1080 = vld [vmem:[%s1077 + $0x10] sm:$0xff]
    %v1081 = vld [vmem:[%s1077 + $0x18] sm:$0xff]
    %1082 = vmatprep.subr.mxu0 %v1014
    %1083 = vmatpush1.msra.mxu0 %v1013
    %1084 = vmatprep.subr.mxu0 %v1018
    %1085 = vmatpush1.msra.mxu0 %v1017
    %1086 = vmatprep.subr.mxu0 %v1022
    %1087 = vmatpush1.msra.mxu0 %v1021
    %1088 = vmatprep.subr.mxu0 %v1026
    %1089 = vmatpush1.msra.mxu0 %v1025
    %1090 = vmatprep.subr.mxu0 %v1030
    %1091 = vmatpush1.msra.mxu0 %v1029
    %1092 = vmatprep.subr.mxu0 %v1034
    %1093 = vmatpush1.msra.mxu0 %v1033
    %1094 = vmatprep.subr.mxu0 %v1038
    %1095 = vmatpush1.msra.mxu0 %v1037
    %1096 = vmatprep.subr.mxu0 %v1042
    %1097 = vmatpush1.msra.mxu0 %v1041
    %1098 = vmatprep.subr.mxu0 %v1046
    %1099 = vmatpush1.msra.mxu0 %v1045
    %1100 = vmatprep.subr.mxu0 %v1050
    %1101 = vmatpush1.msra.mxu0 %v1049
    %1102 = vmatprep.subr.mxu0 %v1054
    %1103 = vmatpush1.msra.mxu0 %v1053
    %1104 = vmatprep.subr.mxu0 %v1058
    %1105 = vmatpush1.msra.mxu0 %v1057
    %1106 = vmatprep.subr.mxu0 %v1062
    %1107 = vmatpush1.msra.mxu0 %v1061
    %1108 = vmatprep.subr.mxu0 %v1066
    %1109 = vmatpush1.msra.mxu0 %v1065
    %1110 = vmatprep.subr.mxu0 %v1070
    %1111 = vmatpush1.msra.mxu0 %v1069
    %1112 = vmatprep.subr.mxu0 %v1074
    %1113 = vmatpush1.msra.mxu0 %v1073
    %1114 = vmatprep.subr.mxu0 0.0
    %1115 = vmatpush1.msra.mxu0 0.0
    %1116 = vmatprep.subr.mxu0 0.0
    %1117 = vmatpush1.msra.mxu0 0.0
    %1118 = vmatprep.subr.mxu0 0.0
    %1119 = vmatpush1.msra.mxu0 0.0
    %1120 = vmatprep.subr.mxu0 0.0
    %1121 = vmatpush1.msra.mxu0 0.0
    %1122 = vmatprep.subr.mxu0 0.0
    %1123 = vmatpush1.msra.mxu0 0.0
    %1124 = vmatprep.subr.mxu0 0.0
    %1125 = vmatpush1.msra.mxu0 0.0
    %1126 = vmatprep.subr.mxu0 0.0
    %1127 = vmatpush1.msra.mxu0 0.0
    %1128 = vmatprep.subr.mxu0 0.0
    %1129 = vmatpush1.msra.mxu0 0.0
    %1130 = vmatprep.subr.mxu0 0.0
    %1131 = vmatpush1.msra.mxu0 0.0
    %1132 = vmatprep.subr.mxu0 0.0
    %1133 = vmatpush1.msra.mxu0 0.0
    %1134 = vmatprep.subr.mxu0 0.0
    %1135 = vmatpush1.msra.mxu0 0.0
    %1136 = vmatprep.subr.mxu0 0.0
    %1137 = vmatpush1.msra.mxu0 0.0
    %1138 = vmatprep.subr.mxu0 0.0
    %1139 = vmatpush1.msra.mxu0 0.0
    %1140 = vmatprep.subr.mxu0 0.0
    %1141 = vmatpush1.msra.mxu0 0.0
    %1142 = vmatprep.subr.mxu0 0.0
    %1143 = vmatpush1.msra.mxu0 0.0
    %1144 = vmatprep.subr.mxu0 0.0
    %1145 = vmatpush1.msra.mxu0 0.0
    %1146 = vmatprep.mubr.f32.mxu0 0.0
    %1147 = vmatmul.mubr.f32.gmra.mrb[0].mxu0 %v1010
    %v1148 = vpop.f32.mrb[0].mxu0
    %v1149 = vadd.f32 0.0, %v1148
    %v1150 = vpop.f32.mrb[0].mxu0
    %v1151 = vadd.f32 0.0, %v1150
    %1152 = vdwg.mxu0
    %1153 = vmatprep.subr.mxu0 %v1016
    %1154 = vmatpush1.msra.mxu0 %v1015
    %1155 = vmatprep.subr.mxu0 %v1020
    %1156 = vmatpush1.msra.mxu0 %v1019
    %1157 = vmatprep.subr.mxu0 %v1024
    %1158 = vmatpush1.msra.mxu0 %v1023
    %1159 = vmatprep.subr.mxu0 %v1028
    %1160 = vmatpush1.msra.mxu0 %v1027
    %1161 = vmatprep.subr.mxu0 %v1032
    %1162 = vmatpush1.msra.mxu0 %v1031
    %1163 = vmatprep.subr.mxu0 %v1036
    %1164 = vmatpush1.msra.mxu0 %v1035
    %1165 = vmatprep.subr.mxu0 %v1040
    %1166 = vmatpush1.msra.mxu0 %v1039
    %1167 = vmatprep.subr.mxu0 %v1044
    %1168 = vmatpush1.msra.mxu0 %v1043
    %1169 = vmatprep.subr.mxu0 %v1048
    %1170 = vmatpush1.msra.mxu0 %v1047
    %1171 = vmatprep.subr.mxu0 %v1052
    %1172 = vmatpush1.msra.mxu0 %v1051
    %1173 = vmatprep.subr.mxu0 %v1056
    %1174 = vmatpush1.msra.mxu0 %v1055
    %1175 = vmatprep.subr.mxu0 %v1060
    %1176 = vmatpush1.msra.mxu0 %v1059
    %1177 = vmatprep.subr.mxu0 %v1064
    %1178 = vmatpush1.msra.mxu0 %v1063
    %1179 = vmatprep.subr.mxu0 %v1068
    %1180 = vmatpush1.msra.mxu0 %v1067
    %1181 = vmatprep.subr.mxu0 %v1072
    %1182 = vmatpush1.msra.mxu0 %v1071
    %1183 = vmatprep.subr.mxu0 %v1076
    %1184 = vmatpush1.msra.mxu0 %v1075
    %1185 = vmatprep.subr.mxu0 0.0
    %1186 = vmatpush1.msra.mxu0 0.0
    %1187 = vmatprep.subr.mxu0 0.0
    %1188 = vmatpush1.msra.mxu0 0.0
    %1189 = vmatprep.subr.mxu0 0.0
    %1190 = vmatpush1.msra.mxu0 0.0
    %1191 = vmatprep.subr.mxu0 0.0
    %1192 = vmatpush1.msra.mxu0 0.0
    %1193 = vmatprep.subr.mxu0 0.0
    %1194 = vmatpush1.msra.mxu0 0.0
    %1195 = vmatprep.subr.mxu0 0.0
    %1196 = vmatpush1.msra.mxu0 0.0
    %1197 = vmatprep.subr.mxu0 0.0
    %1198 = vmatpush1.msra.mxu0 0.0
    %1199 = vmatprep.subr.mxu0 0.0
    %1200 = vmatpush1.msra.mxu0 0.0
    %1201 = vmatprep.subr.mxu0 0.0
    %1202 = vmatpush1.msra.mxu0 0.0
    %1203 = vmatprep.subr.mxu0 0.0
    %1204 = vmatpush1.msra.mxu0 0.0
    %1205 = vmatprep.subr.mxu0 0.0
    %1206 = vmatpush1.msra.mxu0 0.0
    %1207 = vmatprep.subr.mxu0 0.0
    %1208 = vmatpush1.msra.mxu0 0.0
    %1209 = vmatprep.subr.mxu0 0.0
    %1210 = vmatpush1.msra.mxu0 0.0
    %1211 = vmatprep.subr.mxu0 0.0
    %1212 = vmatpush1.msra.mxu0 0.0
    %1213 = vmatprep.subr.mxu0 0.0
    %1214 = vmatpush1.msra.mxu0 0.0
    %1215 = vmatprep.subr.mxu0 0.0
    %1216 = vmatpush1.msra.mxu0 0.0
    %1217 = vmatprep.mubr.f32.mxu0 0.0
    %1218 = vmatmul.mubr.f32.gmra.mrb[0].mxu0 %v1010
    %v1219 = vpop.f32.mrb[0].mxu0
    %v1220 = vadd.f32 0.0, %v1219
    %v1221 = vpop.f32.mrb[0].mxu0
    %v1222 = vadd.f32 0.0, %v1221
    %1223 = vdwg.mxu0
    %v1224 = vadd.f32 %v1078, %v1149
    %v1225 = vadd.f32 %v1079, %v1151
    %v1226 = vadd.f32 %v1080, %v1220
    %v1227 = vadd.f32 %v1081, %v1222
    %v1228 = vxor.u32 %v1224, 2147483648
    %v1229 = vmul.f32 %v1228, 1.442695
    %v1230 = vpow.pop %v1229
    %v1231 = vadd.f32 %v1230, 1.0
    %v1232 = vrcp.pop %v1231
    %v1233 = vmul.f32 1.0, %v1232
    %v1234 = vxor.u32 %v1225, 2147483648
    %v1235 = vmul.f32 %v1234, 1.442695
    %v1236 = vpow.pop %v1235
    %v1237 = vadd.f32 %v1236, 1.0
    %v1238 = vrcp.pop %v1237
    %v1239 = vmul.f32 1.0, %v1238
    %v1240 = vtanh.pop %v1226
    %v1241 = vxor.u32 %v1227, 2147483648
    %v1242 = vmul.f32 %v1241, 1.442695
    %v1243 = vpow.pop %v1242
    %v1244 = vadd.f32 %v1243, 1.0
    %v1245 = vrcp.pop %v1244
    %v1246 = vmul.f32 1.0, %v1245
    %v1247 = vmul.f32 %v1239, %v1008
    %v1248 = vmul.f32 %v1233, %v1240
    %v1249 = vadd.f32 %v1247, %v1248
    %v1250 = vtanh.pop %v1249
    %v1251 = vmul.f32 %v1246, %v1250
    %s1252 = scalar_lea.vmem [#allocation9], 32
    %1253 = vst [vmem:[%s1252] sm:$0xff] %v1251
    %v1254 = vld [vmem:[#allocation4] sm:$0xff]
    %v1255 = vld [vmem:[#allocation4 + $0x8] sm:$0xff]
    %v1256 = vld [vmem:[#allocation4 + $0x10] sm:$0xff]
    %v1257 = vld [vmem:[#allocation4 + $0x18] sm:$0xff]
    %v1258 = vld [vmem:[#allocation4 + $0x20] sm:$0xff]
    %v1259 = vld [vmem:[#allocation4 + $0x28] sm:$0xff]
    %v1260 = vld [vmem:[#allocation4 + $0x30] sm:$0xff]
    %v1261 = vld [vmem:[#allocation4 + $0x38] sm:$0xff]
    %v1262 = vld [vmem:[#allocation4 + $0x40] sm:$0xff]
    %v1263 = vld [vmem:[#allocation4 + $0x48] sm:$0xff]
    %v1264 = vld [vmem:[#allocation4 + $0x50] sm:$0xff]
    %v1265 = vld [vmem:[#allocation4 + $0x58] sm:$0xff]
    %v1266 = vld [vmem:[#allocation4 + $0x60] sm:$0xff]
    %v1267 = vld [vmem:[#allocation4 + $0x68] sm:$0xff]
    %v1268 = vld [vmem:[#allocation4 + $0x70] sm:$0xff]
    %v1269 = vld [vmem:[#allocation4 + $0x78] sm:$0xff]
    %v1270 = vld [vmem:[#allocation4 + $0x80] sm:$0xff]
    %v1271 = vld [vmem:[#allocation4 + $0x88] sm:$0xff]
    %v1272 = vld [vmem:[#allocation4 + $0x90] sm:$0xff]
    %v1273 = vld [vmem:[#allocation4 + $0x98] sm:$0xff]
    %v1274 = vld [vmem:[#allocation4 + $0xa0] sm:$0xff]
    %v1275 = vld [vmem:[#allocation4 + $0xa8] sm:$0xff]
    %v1276 = vld [vmem:[#allocation4 + $0xb0] sm:$0xff]
    %v1277 = vld [vmem:[#allocation4 + $0xb8] sm:$0xff]
    %v1278 = vld [vmem:[#allocation4 + $0xc0] sm:$0xff]
    %v1279 = vld [vmem:[#allocation4 + $0xc8] sm:$0xff]
    %v1280 = vld [vmem:[#allocation4 + $0xd0] sm:$0xff]
    %v1281 = vld [vmem:[#allocation4 + $0xd8] sm:$0xff]
    %v1282 = vld [vmem:[#allocation4 + $0xe0] sm:$0xff]
    %v1283 = vld [vmem:[#allocation4 + $0xe8] sm:$0xff]
    %v1284 = vld [vmem:[#allocation4 + $0xf0] sm:$0xff]
    %v1285 = vld [vmem:[#allocation4 + $0xf8] sm:$0xff]
    %v1286 = vld [vmem:[#allocation4 + $0x100] sm:$0xff]
    %v1287 = vld [vmem:[#allocation4 + $0x108] sm:$0xff]
    %v1288 = vld [vmem:[#allocation4 + $0x110] sm:$0xff]
    %v1289 = vld [vmem:[#allocation4 + $0x118] sm:$0xff]
    %v1290 = vld [vmem:[#allocation4 + $0x120] sm:$0xff]
    %v1291 = vld [vmem:[#allocation4 + $0x128] sm:$0xff]
    %v1292 = vld [vmem:[#allocation4 + $0x130] sm:$0xff]
    %v1293 = vld [vmem:[#allocation4 + $0x138] sm:$0xff]
    %v1294 = vld [vmem:[#allocation4 + $0x140] sm:$0xff]
    %v1295 = vld [vmem:[#allocation4 + $0x148] sm:$0xff]
    %v1296 = vld [vmem:[#allocation4 + $0x150] sm:$0xff]
    %v1297 = vld [vmem:[#allocation4 + $0x158] sm:$0xff]
    %v1298 = vld [vmem:[#allocation4 + $0x160] sm:$0xff]
    %v1299 = vld [vmem:[#allocation4 + $0x168] sm:$0xff]
    %v1300 = vld [vmem:[#allocation4 + $0x170] sm:$0xff]
    %v1301 = vld [vmem:[#allocation4 + $0x178] sm:$0xff]
    %v1302 = vld [vmem:[#allocation4 + $0x180] sm:$0xff]
    %v1303 = vld [vmem:[#allocation4 + $0x188] sm:$0xff]
    %v1304 = vld [vmem:[#allocation4 + $0x190] sm:$0xff]
    %v1305 = vld [vmem:[#allocation4 + $0x198] sm:$0xff]
    %v1306 = vld [vmem:[#allocation4 + $0x1a0] sm:$0xff]
    %v1307 = vld [vmem:[#allocation4 + $0x1a8] sm:$0xff]
    %v1308 = vld [vmem:[#allocation4 + $0x1b0] sm:$0xff]
    %v1309 = vld [vmem:[#allocation4 + $0x1b8] sm:$0xff]
    %v1310 = vld [vmem:[#allocation4 + $0x1c0] sm:$0xff]
    %v1311 = vld [vmem:[#allocation4 + $0x1c8] sm:$0xff]
    %v1312 = vld [vmem:[#allocation4 + $0x1d0] sm:$0xff]
    %v1313 = vld [vmem:[#allocation4 + $0x1d8] sm:$0xff]
    %v1314 = vld [vmem:[#allocation4 + $0x1e0] sm:$0xff]
    %v1315 = vld [vmem:[#allocation4 + $0x1e8] sm:$0xff]
    %v1316 = vld [vmem:[#allocation4 + $0x1f0] sm:$0xff]
    %v1317 = vld [vmem:[#allocation4 + $0x1f8] sm:$0xff]
    %s1318 = scalar_lea.vmem [#allocation6], 160
    %v1319 = vld [vmem:[%s1318] sm:$0xff]
    %v1320 = vld [vmem:[%s1318 + $0x8] sm:$0xff]
    %v1321 = vld [vmem:[%s1318 + $0x10] sm:$0xff]
    %v1322 = vld [vmem:[%s1318 + $0x18] sm:$0xff]
    %1323 = vmatprep.subr.mxu0 %v1255
    %1324 = vmatpush1.msra.mxu0 %v1254
    %1325 = vmatprep.subr.mxu0 %v1259
    %1326 = vmatpush1.msra.mxu0 %v1258
    %1327 = vmatprep.subr.mxu0 %v1263
    %1328 = vmatpush1.msra.mxu0 %v1262
    %1329 = vmatprep.subr.mxu0 %v1267
    %1330 = vmatpush1.msra.mxu0 %v1266
    %1331 = vmatprep.subr.mxu0 %v1271
    %1332 = vmatpush1.msra.mxu0 %v1270
    %1333 = vmatprep.subr.mxu0 %v1275
    %1334 = vmatpush1.msra.mxu0 %v1274
    %1335 = vmatprep.subr.mxu0 %v1279
    %1336 = vmatpush1.msra.mxu0 %v1278
    %1337 = vmatprep.subr.mxu0 %v1283
    %1338 = vmatpush1.msra.mxu0 %v1282
    %1339 = vmatprep.subr.mxu0 %v1287
    %1340 = vmatpush1.msra.mxu0 %v1286
    %1341 = vmatprep.subr.mxu0 %v1291
    %1342 = vmatpush1.msra.mxu0 %v1290
    %1343 = vmatprep.subr.mxu0 %v1295
    %1344 = vmatpush1.msra.mxu0 %v1294
    %1345 = vmatprep.subr.mxu0 %v1299
    %1346 = vmatpush1.msra.mxu0 %v1298
    %1347 = vmatprep.subr.mxu0 %v1303
    %1348 = vmatpush1.msra.mxu0 %v1302
    %1349 = vmatprep.subr.mxu0 %v1307
    %1350 = vmatpush1.msra.mxu0 %v1306
    %1351 = vmatprep.subr.mxu0 %v1311
    %1352 = vmatpush1.msra.mxu0 %v1310
    %1353 = vmatprep.subr.mxu0 %v1315
    %1354 = vmatpush1.msra.mxu0 %v1314
    %1355 = vmatprep.subr.mxu0 0.0
    %1356 = vmatpush1.msra.mxu0 0.0
    %1357 = vmatprep.subr.mxu0 0.0
    %1358 = vmatpush1.msra.mxu0 0.0
    %1359 = vmatprep.subr.mxu0 0.0
    %1360 = vmatpush1.msra.mxu0 0.0
    %1361 = vmatprep.subr.mxu0 0.0
    %1362 = vmatpush1.msra.mxu0 0.0
    %1363 = vmatprep.subr.mxu0 0.0
    %1364 = vmatpush1.msra.mxu0 0.0
    %1365 = vmatprep.subr.mxu0 0.0
    %1366 = vmatpush1.msra.mxu0 0.0
    %1367 = vmatprep.subr.mxu0 0.0
    %1368 = vmatpush1.msra.mxu0 0.0
    %1369 = vmatprep.subr.mxu0 0.0
    %1370 = vmatpush1.msra.mxu0 0.0
    %1371 = vmatprep.subr.mxu0 0.0
    %1372 = vmatpush1.msra.mxu0 0.0
    %1373 = vmatprep.subr.mxu0 0.0
    %1374 = vmatpush1.msra.mxu0 0.0
    %1375 = vmatprep.subr.mxu0 0.0
    %1376 = vmatpush1.msra.mxu0 0.0
    %1377 = vmatprep.subr.mxu0 0.0
    %1378 = vmatpush1.msra.mxu0 0.0
    %1379 = vmatprep.subr.mxu0 0.0
    %1380 = vmatpush1.msra.mxu0 0.0
    %1381 = vmatprep.subr.mxu0 0.0
    %1382 = vmatpush1.msra.mxu0 0.0
    %1383 = vmatprep.subr.mxu0 0.0
    %1384 = vmatpush1.msra.mxu0 0.0
    %1385 = vmatprep.subr.mxu0 0.0
    %1386 = vmatpush1.msra.mxu0 0.0
    %1387 = vmatprep.mubr.f32.mxu0 0.0
    %1388 = vmatmul.mubr.f32.gmra.mrb[0].mxu0 %v1251
    %v1389 = vpop.f32.mrb[0].mxu0
    %v1390 = vadd.f32 0.0, %v1389
    %v1391 = vpop.f32.mrb[0].mxu0
    %v1392 = vadd.f32 0.0, %v1391
    %1393 = vdwg.mxu0
    %1394 = vmatprep.subr.mxu0 %v1257
    %1395 = vmatpush1.msra.mxu0 %v1256
    %1396 = vmatprep.subr.mxu0 %v1261
    %1397 = vmatpush1.msra.mxu0 %v1260
    %1398 = vmatprep.subr.mxu0 %v1265
    %1399 = vmatpush1.msra.mxu0 %v1264
    %1400 = vmatprep.subr.mxu0 %v1269
    %1401 = vmatpush1.msra.mxu0 %v1268
    %1402 = vmatprep.subr.mxu0 %v1273
    %1403 = vmatpush1.msra.mxu0 %v1272
    %1404 = vmatprep.subr.mxu0 %v1277
    %1405 = vmatpush1.msra.mxu0 %v1276
    %1406 = vmatprep.subr.mxu0 %v1281
    %1407 = vmatpush1.msra.mxu0 %v1280
    %1408 = vmatprep.subr.mxu0 %v1285
    %1409 = vmatpush1.msra.mxu0 %v1284
    %1410 = vmatprep.subr.mxu0 %v1289
    %1411 = vmatpush1.msra.mxu0 %v1288
    %1412 = vmatprep.subr.mxu0 %v1293
    %1413 = vmatpush1.msra.mxu0 %v1292
    %1414 = vmatprep.subr.mxu0 %v1297
    %1415 = vmatpush1.msra.mxu0 %v1296
    %1416 = vmatprep.subr.mxu0 %v1301
    %1417 = vmatpush1.msra.mxu0 %v1300
    %1418 = vmatprep.subr.mxu0 %v1305
    %1419 = vmatpush1.msra.mxu0 %v1304
    %1420 = vmatprep.subr.mxu0 %v1309
    %1421 = vmatpush1.msra.mxu0 %v1308
    %1422 = vmatprep.subr.mxu0 %v1313
    %1423 = vmatpush1.msra.mxu0 %v1312
    %1424 = vmatprep.subr.mxu0 %v1317
    %1425 = vmatpush1.msra.mxu0 %v1316
    %1426 = vmatprep.subr.mxu0 0.0
    %1427 = vmatpush1.msra.mxu0 0.0
    %1428 = vmatprep.subr.mxu0 0.0
    %1429 = vmatpush1.msra.mxu0 0.0
    %1430 = vmatprep.subr.mxu0 0.0
    %1431 = vmatpush1.msra.mxu0 0.0
    %1432 = vmatprep.subr.mxu0 0.0
    %1433 = vmatpush1.msra.mxu0 0.0
    %1434 = vmatprep.subr.mxu0 0.0
    %1435 = vmatpush1.msra.mxu0 0.0
    %1436 = vmatprep.subr.mxu0 0.0
    %1437 = vmatpush1.msra.mxu0 0.0
    %1438 = vmatprep.subr.mxu0 0.0
    %1439 = vmatpush1.msra.mxu0 0.0
    %1440 = vmatprep.subr.mxu0 0.0
    %1441 = vmatpush1.msra.mxu0 0.0
    %1442 = vmatprep.subr.mxu0 0.0
    %1443 = vmatpush1.msra.mxu0 0.0
    %1444 = vmatprep.subr.mxu0 0.0
    %1445 = vmatpush1.msra.mxu0 0.0
    %1446 = vmatprep.subr.mxu0 0.0
    %1447 = vmatpush1.msra.mxu0 0.0
    %1448 = vmatprep.subr.mxu0 0.0
    %1449 = vmatpush1.msra.mxu0 0.0
    %1450 = vmatprep.subr.mxu0 0.0
    %1451 = vmatpush1.msra.mxu0 0.0
    %1452 = vmatprep.subr.mxu0 0.0
    %1453 = vmatpush1.msra.mxu0 0.0
    %1454 = vmatprep.subr.mxu0 0.0
    %1455 = vmatpush1.msra.mxu0 0.0
    %1456 = vmatprep.subr.mxu0 0.0
    %1457 = vmatpush1.msra.mxu0 0.0
    %1458 = vmatprep.mubr.f32.mxu0 0.0
    %1459 = vmatmul.mubr.f32.gmra.mrb[0].mxu0 %v1251
    %v1460 = vpop.f32.mrb[0].mxu0
    %v1461 = vadd.f32 0.0, %v1460
    %v1462 = vpop.f32.mrb[0].mxu0
    %v1463 = vadd.f32 0.0, %v1462
    %1464 = vdwg.mxu0
    %v1465 = vadd.f32 %v1319, %v1390
    %v1466 = vadd.f32 %v1320, %v1392
    %v1467 = vadd.f32 %v1321, %v1461
    %v1468 = vadd.f32 %v1322, %v1463
    %v1469 = vxor.u32 %v1465, 2147483648
    %v1470 = vmul.f32 %v1469, 1.442695
    %v1471 = vpow.pop %v1470
    %v1472 = vadd.f32 %v1471, 1.0
    %v1473 = vrcp.pop %v1472
    %v1474 = vmul.f32 1.0, %v1473
    %v1475 = vxor.u32 %v1466, 2147483648
    %v1476 = vmul.f32 %v1475, 1.442695
    %v1477 = vpow.pop %v1476
    %v1478 = vadd.f32 %v1477, 1.0
    %v1479 = vrcp.pop %v1478
    %v1480 = vmul.f32 1.0, %v1479
    %v1481 = vtanh.pop %v1467
    %v1482 = vxor.u32 %v1468, 2147483648
    %v1483 = vmul.f32 %v1482, 1.442695
    %v1484 = vpow.pop %v1483
    %v1485 = vadd.f32 %v1484, 1.0
    %v1486 = vrcp.pop %v1485
    %v1487 = vmul.f32 1.0, %v1486
    %v1488 = vmul.f32 %v1480, %v1249
    %v1489 = vmul.f32 %v1474, %v1481
    %v1490 = vadd.f32 %v1488, %v1489
    %v1491 = vtanh.pop %v1490
    %v1492 = vmul.f32 %v1487, %v1491
    %s1493 = scalar_lea.vmem [#allocation9], 40
    %1494 = vst [vmem:[%s1493] sm:$0xff] %v1492
    %v1495 = vld [vmem:[#allocation4] sm:$0xff]
    %v1496 = vld [vmem:[#allocation4 + $0x8] sm:$0xff]
    %v1497 = vld [vmem:[#allocation4 + $0x10] sm:$0xff]
    %v1498 = vld [vmem:[#allocation4 + $0x18] sm:$0xff]
    %v1499 = vld [vmem:[#allocation4 + $0x20] sm:$0xff]
    %v1500 = vld [vmem:[#allocation4 + $0x28] sm:$0xff]
    %v1501 = vld [vmem:[#allocation4 + $0x30] sm:$0xff]
    %v1502 = vld [vmem:[#allocation4 + $0x38] sm:$0xff]
    %v1503 = vld [vmem:[#allocation4 + $0x40] sm:$0xff]
    %v1504 = vld [vmem:[#allocation4 + $0x48] sm:$0xff]
    %v1505 = vld [vmem:[#allocation4 + $0x50] sm:$0xff]
    %v1506 = vld [vmem:[#allocation4 + $0x58] sm:$0xff]
    %v1507 = vld [vmem:[#allocation4 + $0x60] sm:$0xff]
    %v1508 = vld [vmem:[#allocation4 + $0x68] sm:$0xff]
    %v1509 = vld [vmem:[#allocation4 + $0x70] sm:$0xff]
    %v1510 = vld [vmem:[#allocation4 + $0x78] sm:$0xff]
    %v1511 = vld [vmem:[#allocation4 + $0x80] sm:$0xff]
    %v1512 = vld [vmem:[#allocation4 + $0x88] sm:$0xff]
    %v1513 = vld [vmem:[#allocation4 + $0x90] sm:$0xff]
    %v1514 = vld [vmem:[#allocation4 + $0x98] sm:$0xff]
    %v1515 = vld [vmem:[#allocation4 + $0xa0] sm:$0xff]
    %v1516 = vld [vmem:[#allocation4 + $0xa8] sm:$0xff]
    %v1517 = vld [vmem:[#allocation4 + $0xb0] sm:$0xff]
    %v1518 = vld [vmem:[#allocation4 + $0xb8] sm:$0xff]
    %v1519 = vld [vmem:[#allocation4 + $0xc0] sm:$0xff]
    %v1520 = vld [vmem:[#allocation4 + $0xc8] sm:$0xff]
    %v1521 = vld [vmem:[#allocation4 + $0xd0] sm:$0xff]
    %v1522 = vld [vmem:[#allocation4 + $0xd8] sm:$0xff]
    %v1523 = vld [vmem:[#allocation4 + $0xe0] sm:$0xff]
    %v1524 = vld [vmem:[#allocation4 + $0xe8] sm:$0xff]
    %v1525 = vld [vmem:[#allocation4 + $0xf0] sm:$0xff]
    %v1526 = vld [vmem:[#allocation4 + $0xf8] sm:$0xff]
    %v1527 = vld [vmem:[#allocation4 + $0x100] sm:$0xff]
    %v1528 = vld [vmem:[#allocation4 + $0x108] sm:$0xff]
    %v1529 = vld [vmem:[#allocation4 + $0x110] sm:$0xff]
    %v1530 = vld [vmem:[#allocation4 + $0x118] sm:$0xff]
    %v1531 = vld [vmem:[#allocation4 + $0x120] sm:$0xff]
    %v1532 = vld [vmem:[#allocation4 + $0x128] sm:$0xff]
    %v1533 = vld [vmem:[#allocation4 + $0x130] sm:$0xff]
    %v1534 = vld [vmem:[#allocation4 + $0x138] sm:$0xff]
    %v1535 = vld [vmem:[#allocation4 + $0x140] sm:$0xff]
    %v1536 = vld [vmem:[#allocation4 + $0x148] sm:$0xff]
    %v1537 = vld [vmem:[#allocation4 + $0x150] sm:$0xff]
    %v1538 = vld [vmem:[#allocation4 + $0x158] sm:$0xff]
    %v1539 = vld [vmem:[#allocation4 + $0x160] sm:$0xff]
    %v1540 = vld [vmem:[#allocation4 + $0x168] sm:$0xff]
    %v1541 = vld [vmem:[#allocation4 + $0x170] sm:$0xff]
    %v1542 = vld [vmem:[#allocation4 + $0x178] sm:$0xff]
    %v1543 = vld [vmem:[#allocation4 + $0x180] sm:$0xff]
    %v1544 = vld [vmem:[#allocation4 + $0x188] sm:$0xff]
    %v1545 = vld [vmem:[#allocation4 + $0x190] sm:$0xff]
    %v1546 = vld [vmem:[#allocation4 + $0x198] sm:$0xff]
    %v1547 = vld [vmem:[#allocation4 + $0x1a0] sm:$0xff]
    %v1548 = vld [vmem:[#allocation4 + $0x1a8] sm:$0xff]
    %v1549 = vld [vmem:[#allocation4 + $0x1b0] sm:$0xff]
    %v1550 = vld [vmem:[#allocation4 + $0x1b8] sm:$0xff]
    %v1551 = vld [vmem:[#allocation4 + $0x1c0] sm:$0xff]
    %v1552 = vld [vmem:[#allocation4 + $0x1c8] sm:$0xff]
    %v1553 = vld [vmem:[#allocation4 + $0x1d0] sm:$0xff]
    %v1554 = vld [vmem:[#allocation4 + $0x1d8] sm:$0xff]
    %v1555 = vld [vmem:[#allocation4 + $0x1e0] sm:$0xff]
    %v1556 = vld [vmem:[#allocation4 + $0x1e8] sm:$0xff]
    %v1557 = vld [vmem:[#allocation4 + $0x1f0] sm:$0xff]
    %v1558 = vld [vmem:[#allocation4 + $0x1f8] sm:$0xff]
    %s1559 = scalar_lea.vmem [#allocation6], 192
    %v1560 = vld [vmem:[%s1559] sm:$0xff]
    %v1561 = vld [vmem:[%s1559 + $0x8] sm:$0xff]
    %v1562 = vld [vmem:[%s1559 + $0x10] sm:$0xff]
    %v1563 = vld [vmem:[%s1559 + $0x18] sm:$0xff]
    %1564 = vmatprep.subr.mxu0 %v1496
    %1565 = vmatpush1.msra.mxu0 %v1495
    %1566 = vmatprep.subr.mxu0 %v1500
    %1567 = vmatpush1.msra.mxu0 %v1499
    %1568 = vmatprep.subr.mxu0 %v1504
    %1569 = vmatpush1.msra.mxu0 %v1503
    %1570 = vmatprep.subr.mxu0 %v1508
    %1571 = vmatpush1.msra.mxu0 %v1507
    %1572 = vmatprep.subr.mxu0 %v1512
    %1573 = vmatpush1.msra.mxu0 %v1511
    %1574 = vmatprep.subr.mxu0 %v1516
    %1575 = vmatpush1.msra.mxu0 %v1515
    %1576 = vmatprep.subr.mxu0 %v1520
    %1577 = vmatpush1.msra.mxu0 %v1519
    %1578 = vmatprep.subr.mxu0 %v1524
    %1579 = vmatpush1.msra.mxu0 %v1523
    %1580 = vmatprep.subr.mxu0 %v1528
    %1581 = vmatpush1.msra.mxu0 %v1527
    %1582 = vmatprep.subr.mxu0 %v1532
    %1583 = vmatpush1.msra.mxu0 %v1531
    %1584 = vmatprep.subr.mxu0 %v1536
    %1585 = vmatpush1.msra.mxu0 %v1535
    %1586 = vmatprep.subr.mxu0 %v1540
    %1587 = vmatpush1.msra.mxu0 %v1539
    %1588 = vmatprep.subr.mxu0 %v1544
    %1589 = vmatpush1.msra.mxu0 %v1543
    %1590 = vmatprep.subr.mxu0 %v1548
    %1591 = vmatpush1.msra.mxu0 %v1547
    %1592 = vmatprep.subr.mxu0 %v1552
    %1593 = vmatpush1.msra.mxu0 %v1551
    %1594 = vmatprep.subr.mxu0 %v1556
    %1595 = vmatpush1.msra.mxu0 %v1555
    %1596 = vmatprep.subr.mxu0 0.0
    %1597 = vmatpush1.msra.mxu0 0.0
    %1598 = vmatprep.subr.mxu0 0.0
    %1599 = vmatpush1.msra.mxu0 0.0
    %1600 = vmatprep.subr.mxu0 0.0
    %1601 = vmatpush1.msra.mxu0 0.0
    %1602 = vmatprep.subr.mxu0 0.0
    %1603 = vmatpush1.msra.mxu0 0.0
    %1604 = vmatprep.subr.mxu0 0.0
    %1605 = vmatpush1.msra.mxu0 0.0
    %1606 = vmatprep.subr.mxu0 0.0
    %1607 = vmatpush1.msra.mxu0 0.0
    %1608 = vmatprep.subr.mxu0 0.0
    %1609 = vmatpush1.msra.mxu0 0.0
    %1610 = vmatprep.subr.mxu0 0.0
    %1611 = vmatpush1.msra.mxu0 0.0
    %1612 = vmatprep.subr.mxu0 0.0
    %1613 = vmatpush1.msra.mxu0 0.0
    %1614 = vmatprep.subr.mxu0 0.0
    %1615 = vmatpush1.msra.mxu0 0.0
    %1616 = vmatprep.subr.mxu0 0.0
    %1617 = vmatpush1.msra.mxu0 0.0
    %1618 = vmatprep.subr.mxu0 0.0
    %1619 = vmatpush1.msra.mxu0 0.0
    %1620 = vmatprep.subr.mxu0 0.0
    %1621 = vmatpush1.msra.mxu0 0.0
    %1622 = vmatprep.subr.mxu0 0.0
    %1623 = vmatpush1.msra.mxu0 0.0
    %1624 = vmatprep.subr.mxu0 0.0
    %1625 = vmatpush1.msra.mxu0 0.0
    %1626 = vmatprep.subr.mxu0 0.0
    %1627 = vmatpush1.msra.mxu0 0.0
    %1628 = vmatprep.mubr.f32.mxu0 0.0
    %1629 = vmatmul.mubr.f32.gmra.mrb[0].mxu0 %v1492
    %v1630 = vpop.f32.mrb[0].mxu0
    %v1631 = vadd.f32 0.0, %v1630
    %v1632 = vpop.f32.mrb[0].mxu0
    %v1633 = vadd.f32 0.0, %v1632
    %1634 = vdwg.mxu0
    %1635 = vmatprep.subr.mxu0 %v1498
    %1636 = vmatpush1.msra.mxu0 %v1497
    %1637 = vmatprep.subr.mxu0 %v1502
    %1638 = vmatpush1.msra.mxu0 %v1501
    %1639 = vmatprep.subr.mxu0 %v1506
    %1640 = vmatpush1.msra.mxu0 %v1505
    %1641 = vmatprep.subr.mxu0 %v1510
    %1642 = vmatpush1.msra.mxu0 %v1509
    %1643 = vmatprep.subr.mxu0 %v1514
    %1644 = vmatpush1.msra.mxu0 %v1513
    %1645 = vmatprep.subr.mxu0 %v1518
    %1646 = vmatpush1.msra.mxu0 %v1517
    %1647 = vmatprep.subr.mxu0 %v1522
    %1648 = vmatpush1.msra.mxu0 %v1521
    %1649 = vmatprep.subr.mxu0 %v1526
    %1650 = vmatpush1.msra.mxu0 %v1525
    %1651 = vmatprep.subr.mxu0 %v1530
    %1652 = vmatpush1.msra.mxu0 %v1529
    %1653 = vmatprep.subr.mxu0 %v1534
    %1654 = vmatpush1.msra.mxu0 %v1533
    %1655 = vmatprep.subr.mxu0 %v1538
    %1656 = vmatpush1.msra.mxu0 %v1537
    %1657 = vmatprep.subr.mxu0 %v1542
    %1658 = vmatpush1.msra.mxu0 %v1541
    %1659 = vmatprep.subr.mxu0 %v1546
    %1660 = vmatpush1.msra.mxu0 %v1545
    %1661 = vmatprep.subr.mxu0 %v1550
    %1662 = vmatpush1.msra.mxu0 %v1549
    %1663 = vmatprep.subr.mxu0 %v1554
    %1664 = vmatpush1.msra.mxu0 %v1553
    %1665 = vmatprep.subr.mxu0 %v1558
    %1666 = vmatpush1.msra.mxu0 %v1557
    %1667 = vmatprep.subr.mxu0 0.0
    %1668 = vmatpush1.msra.mxu0 0.0
    %1669 = vmatprep.subr.mxu0 0.0
    %1670 = vmatpush1.msra.mxu0 0.0
    %1671 = vmatprep.subr.mxu0 0.0
    %1672 = vmatpush1.msra.mxu0 0.0
    %1673 = vmatprep.subr.mxu0 0.0
    %1674 = vmatpush1.msra.mxu0 0.0
    %1675 = vmatprep.subr.mxu0 0.0
    %1676 = vmatpush1.msra.mxu0 0.0
    %1677 = vmatprep.subr.mxu0 0.0
    %1678 = vmatpush1.msra.mxu0 0.0
    %1679 = vmatprep.subr.mxu0 0.0
    %1680 = vmatpush1.msra.mxu0 0.0
    %1681 = vmatprep.subr.mxu0 0.0
    %1682 = vmatpush1.msra.mxu0 0.0
    %1683 = vmatprep.subr.mxu0 0.0
    %1684 = vmatpush1.msra.mxu0 0.0
    %1685 = vmatprep.subr.mxu0 0.0
    %1686 = vmatpush1.msra.mxu0 0.0
    %1687 = vmatprep.subr.mxu0 0.0
    %1688 = vmatpush1.msra.mxu0 0.0
    %1689 = vmatprep.subr.mxu0 0.0
    %1690 = vmatpush1.msra.mxu0 0.0
    %1691 = vmatprep.subr.mxu0 0.0
    %1692 = vmatpush1.msra.mxu0 0.0
    %1693 = vmatprep.subr.mxu0 0.0
    %1694 = vmatpush1.msra.mxu0 0.0
    %1695 = vmatprep.subr.mxu0 0.0
    %1696 = vmatpush1.msra.mxu0 0.0
    %1697 = vmatprep.subr.mxu0 0.0
    %1698 = vmatpush1.msra.mxu0 0.0
    %1699 = vmatprep.mubr.f32.mxu0 0.0
    %1700 = vmatmul.mubr.f32.gmra.mrb[0].mxu0 %v1492
    %v1701 = vpop.f32.mrb[0].mxu0
    %v1702 = vadd.f32 0.0, %v1701
    %v1703 = vpop.f32.mrb[0].mxu0
    %v1704 = vadd.f32 0.0, %v1703
    %1705 = vdwg.mxu0
    %v1706 = vadd.f32 %v1560, %v1631
    %v1707 = vadd.f32 %v1561, %v1633
    %v1708 = vadd.f32 %v1562, %v1702
    %v1709 = vadd.f32 %v1563, %v1704
    %v1710 = vxor.u32 %v1706, 2147483648
    %v1711 = vmul.f32 %v1710, 1.442695
    %v1712 = vpow.pop %v1711
    %v1713 = vadd.f32 %v1712, 1.0
    %v1714 = vrcp.pop %v1713
    %v1715 = vmul.f32 1.0, %v1714
    %v1716 = vxor.u32 %v1707, 2147483648
    %v1717 = vmul.f32 %v1716, 1.442695
    %v1718 = vpow.pop %v1717
    %v1719 = vadd.f32 %v1718, 1.0
    %v1720 = vrcp.pop %v1719
    %v1721 = vmul.f32 1.0, %v1720
    %v1722 = vtanh.pop %v1708
    %v1723 = vxor.u32 %v1709, 2147483648
    %v1724 = vmul.f32 %v1723, 1.442695
    %v1725 = vpow.pop %v1724
    %v1726 = vadd.f32 %v1725, 1.0
    %v1727 = vrcp.pop %v1726
    %v1728 = vmul.f32 1.0, %v1727
    %v1729 = vmul.f32 %v1721, %v1490
    %v1730 = vmul.f32 %v1715, %v1722
    %v1731 = vadd.f32 %v1729, %v1730
    %v1732 = vtanh.pop %v1731
    %v1733 = vmul.f32 %v1728, %v1732
    %s1734 = scalar_lea.vmem [#allocation9], 48
    %1735 = vst [vmem:[%s1734] sm:$0xff] %v1733
    %v1736 = vld [vmem:[#allocation4] sm:$0xff]
    %v1737 = vld [vmem:[#allocation4 + $0x8] sm:$0xff]
    %v1738 = vld [vmem:[#allocation4 + $0x10] sm:$0xff]
    %v1739 = vld [vmem:[#allocation4 + $0x18] sm:$0xff]
    %v1740 = vld [vmem:[#allocation4 + $0x20] sm:$0xff]
    %v1741 = vld [vmem:[#allocation4 + $0x28] sm:$0xff]
    %v1742 = vld [vmem:[#allocation4 + $0x30] sm:$0xff]
    %v1743 = vld [vmem:[#allocation4 + $0x38] sm:$0xff]
    %v1744 = vld [vmem:[#allocation4 + $0x40] sm:$0xff]
    %v1745 = vld [vmem:[#allocation4 + $0x48] sm:$0xff]
    %v1746 = vld [vmem:[#allocation4 + $0x50] sm:$0xff]
    %v1747 = vld [vmem:[#allocation4 + $0x58] sm:$0xff]
    %v1748 = vld [vmem:[#allocation4 + $0x60] sm:$0xff]
    %v1749 = vld [vmem:[#allocation4 + $0x68] sm:$0xff]
    %v1750 = vld [vmem:[#allocation4 + $0x70] sm:$0xff]
    %v1751 = vld [vmem:[#allocation4 + $0x78] sm:$0xff]
    %v1752 = vld [vmem:[#allocation4 + $0x80] sm:$0xff]
    %v1753 = vld [vmem:[#allocation4 + $0x88] sm:$0xff]
    %v1754 = vld [vmem:[#allocation4 + $0x90] sm:$0xff]
    %v1755 = vld [vmem:[#allocation4 + $0x98] sm:$0xff]
    %v1756 = vld [vmem:[#allocation4 + $0xa0] sm:$0xff]
    %v1757 = vld [vmem:[#allocation4 + $0xa8] sm:$0xff]
    %v1758 = vld [vmem:[#allocation4 + $0xb0] sm:$0xff]
    %v1759 = vld [vmem:[#allocation4 + $0xb8] sm:$0xff]
    %v1760 = vld [vmem:[#allocation4 + $0xc0] sm:$0xff]
    %v1761 = vld [vmem:[#allocation4 + $0xc8] sm:$0xff]
    %v1762 = vld [vmem:[#allocation4 + $0xd0] sm:$0xff]
    %v1763 = vld [vmem:[#allocation4 + $0xd8] sm:$0xff]
    %v1764 = vld [vmem:[#allocation4 + $0xe0] sm:$0xff]
    %v1765 = vld [vmem:[#allocation4 + $0xe8] sm:$0xff]
    %v1766 = vld [vmem:[#allocation4 + $0xf0] sm:$0xff]
    %v1767 = vld [vmem:[#allocation4 + $0xf8] sm:$0xff]
    %v1768 = vld [vmem:[#allocation4 + $0x100] sm:$0xff]
    %v1769 = vld [vmem:[#allocation4 + $0x108] sm:$0xff]
    %v1770 = vld [vmem:[#allocation4 + $0x110] sm:$0xff]
    %v1771 = vld [vmem:[#allocation4 + $0x118] sm:$0xff]
    %v1772 = vld [vmem:[#allocation4 + $0x120] sm:$0xff]
    %v1773 = vld [vmem:[#allocation4 + $0x128] sm:$0xff]
    %v1774 = vld [vmem:[#allocation4 + $0x130] sm:$0xff]
    %v1775 = vld [vmem:[#allocation4 + $0x138] sm:$0xff]
    %v1776 = vld [vmem:[#allocation4 + $0x140] sm:$0xff]
    %v1777 = vld [vmem:[#allocation4 + $0x148] sm:$0xff]
    %v1778 = vld [vmem:[#allocation4 + $0x150] sm:$0xff]
    %v1779 = vld [vmem:[#allocation4 + $0x158] sm:$0xff]
    %v1780 = vld [vmem:[#allocation4 + $0x160] sm:$0xff]
    %v1781 = vld [vmem:[#allocation4 + $0x168] sm:$0xff]
    %v1782 = vld [vmem:[#allocation4 + $0x170] sm:$0xff]
    %v1783 = vld [vmem:[#allocation4 + $0x178] sm:$0xff]
    %v1784 = vld [vmem:[#allocation4 + $0x180] sm:$0xff]
    %v1785 = vld [vmem:[#allocation4 + $0x188] sm:$0xff]
    %v1786 = vld [vmem:[#allocation4 + $0x190] sm:$0xff]
    %v1787 = vld [vmem:[#allocation4 + $0x198] sm:$0xff]
    %v1788 = vld [vmem:[#allocation4 + $0x1a0] sm:$0xff]
    %v1789 = vld [vmem:[#allocation4 + $0x1a8] sm:$0xff]
    %v1790 = vld [vmem:[#allocation4 + $0x1b0] sm:$0xff]
    %v1791 = vld [vmem:[#allocation4 + $0x1b8] sm:$0xff]
    %v1792 = vld [vmem:[#allocation4 + $0x1c0] sm:$0xff]
    %v1793 = vld [vmem:[#allocation4 + $0x1c8] sm:$0xff]
    %v1794 = vld [vmem:[#allocation4 + $0x1d0] sm:$0xff]
    %v1795 = vld [vmem:[#allocation4 + $0x1d8] sm:$0xff]
    %v1796 = vld [vmem:[#allocation4 + $0x1e0] sm:$0xff]
    %v1797 = vld [vmem:[#allocation4 + $0x1e8] sm:$0xff]
    %v1798 = vld [vmem:[#allocation4 + $0x1f0] sm:$0xff]
    %v1799 = vld [vmem:[#allocation4 + $0x1f8] sm:$0xff]
    %s1800 = scalar_lea.vmem [#allocation6], 224
    %v1801 = vld [vmem:[%s1800] sm:$0xff]
    %v1802 = vld [vmem:[%s1800 + $0x8] sm:$0xff]
    %v1803 = vld [vmem:[%s1800 + $0x10] sm:$0xff]
    %v1804 = vld [vmem:[%s1800 + $0x18] sm:$0xff]
    %1805 = vmatprep.subr.mxu0 %v1737
    %1806 = vmatpush1.msra.mxu0 %v1736
    %1807 = vmatprep.subr.mxu0 %v1741
    %1808 = vmatpush1.msra.mxu0 %v1740
    %1809 = vmatprep.subr.mxu0 %v1745
    %1810 = vmatpush1.msra.mxu0 %v1744
    %1811 = vmatprep.subr.mxu0 %v1749
    %1812 = vmatpush1.msra.mxu0 %v1748
    %1813 = vmatprep.subr.mxu0 %v1753
    %1814 = vmatpush1.msra.mxu0 %v1752
    %1815 = vmatprep.subr.mxu0 %v1757
    %1816 = vmatpush1.msra.mxu0 %v1756
    %1817 = vmatprep.subr.mxu0 %v1761
    %1818 = vmatpush1.msra.mxu0 %v1760
    %1819 = vmatprep.subr.mxu0 %v1765
    %1820 = vmatpush1.msra.mxu0 %v1764
    %1821 = vmatprep.subr.mxu0 %v1769
    %1822 = vmatpush1.msra.mxu0 %v1768
    %1823 = vmatprep.subr.mxu0 %v1773
    %1824 = vmatpush1.msra.mxu0 %v1772
    %1825 = vmatprep.subr.mxu0 %v1777
    %1826 = vmatpush1.msra.mxu0 %v1776
    %1827 = vmatprep.subr.mxu0 %v1781
    %1828 = vmatpush1.msra.mxu0 %v1780
    %1829 = vmatprep.subr.mxu0 %v1785
    %1830 = vmatpush1.msra.mxu0 %v1784
    %1831 = vmatprep.subr.mxu0 %v1789
    %1832 = vmatpush1.msra.mxu0 %v1788
    %1833 = vmatprep.subr.mxu0 %v1793
    %1834 = vmatpush1.msra.mxu0 %v1792
    %1835 = vmatprep.subr.mxu0 %v1797
    %1836 = vmatpush1.msra.mxu0 %v1796
    %1837 = vmatprep.subr.mxu0 0.0
    %1838 = vmatpush1.msra.mxu0 0.0
    %1839 = vmatprep.subr.mxu0 0.0
    %1840 = vmatpush1.msra.mxu0 0.0
    %1841 = vmatprep.subr.mxu0 0.0
    %1842 = vmatpush1.msra.mxu0 0.0
    %1843 = vmatprep.subr.mxu0 0.0
    %1844 = vmatpush1.msra.mxu0 0.0
    %1845 = vmatprep.subr.mxu0 0.0
    %1846 = vmatpush1.msra.mxu0 0.0
    %1847 = vmatprep.subr.mxu0 0.0
    %1848 = vmatpush1.msra.mxu0 0.0
    %1849 = vmatprep.subr.mxu0 0.0
    %1850 = vmatpush1.msra.mxu0 0.0
    %1851 = vmatprep.subr.mxu0 0.0
    %1852 = vmatpush1.msra.mxu0 0.0
    %1853 = vmatprep.subr.mxu0 0.0
    %1854 = vmatpush1.msra.mxu0 0.0
    %1855 = vmatprep.subr.mxu0 0.0
    %1856 = vmatpush1.msra.mxu0 0.0
    %1857 = vmatprep.subr.mxu0 0.0
    %1858 = vmatpush1.msra.mxu0 0.0
    %1859 = vmatprep.subr.mxu0 0.0
    %1860 = vmatpush1.msra.mxu0 0.0
    %1861 = vmatprep.subr.mxu0 0.0
    %1862 = vmatpush1.msra.mxu0 0.0
    %1863 = vmatprep.subr.mxu0 0.0
    %1864 = vmatpush1.msra.mxu0 0.0
    %1865 = vmatprep.subr.mxu0 0.0
    %1866 = vmatpush1.msra.mxu0 0.0
    %1867 = vmatprep.subr.mxu0 0.0
    %1868 = vmatpush1.msra.mxu0 0.0
    %1869 = vmatprep.mubr.f32.mxu0 0.0
    %1870 = vmatmul.mubr.f32.gmra.mrb[0].mxu0 %v1733
    %v1871 = vpop.f32.mrb[0].mxu0
    %v1872 = vadd.f32 0.0, %v1871
    %v1873 = vpop.f32.mrb[0].mxu0
    %v1874 = vadd.f32 0.0, %v1873
    %1875 = vdwg.mxu0
    %1876 = vmatprep.subr.mxu0 %v1739
    %1877 = vmatpush1.msra.mxu0 %v1738
    %1878 = vmatprep.subr.mxu0 %v1743
    %1879 = vmatpush1.msra.mxu0 %v1742
    %1880 = vmatprep.subr.mxu0 %v1747
    %1881 = vmatpush1.msra.mxu0 %v1746
    %1882 = vmatprep.subr.mxu0 %v1751
    %1883 = vmatpush1.msra.mxu0 %v1750
    %1884 = vmatprep.subr.mxu0 %v1755
    %1885 = vmatpush1.msra.mxu0 %v1754
    %1886 = vmatprep.subr.mxu0 %v1759
    %1887 = vmatpush1.msra.mxu0 %v1758
    %1888 = vmatprep.subr.mxu0 %v1763
    %1889 = vmatpush1.msra.mxu0 %v1762
    %1890 = vmatprep.subr.mxu0 %v1767
    %1891 = vmatpush1.msra.mxu0 %v1766
    %1892 = vmatprep.subr.mxu0 %v1771
    %1893 = vmatpush1.msra.mxu0 %v1770
    %1894 = vmatprep.subr.mxu0 %v1775
    %1895 = vmatpush1.msra.mxu0 %v1774
    %1896 = vmatprep.subr.mxu0 %v1779
    %1897 = vmatpush1.msra.mxu0 %v1778
    %1898 = vmatprep.subr.mxu0 %v1783
    %1899 = vmatpush1.msra.mxu0 %v1782
    %1900 = vmatprep.subr.mxu0 %v1787
    %1901 = vmatpush1.msra.mxu0 %v1786
    %1902 = vmatprep.subr.mxu0 %v1791
    %1903 = vmatpush1.msra.mxu0 %v1790
    %1904 = vmatprep.subr.mxu0 %v1795
    %1905 = vmatpush1.msra.mxu0 %v1794
    %1906 = vmatprep.subr.mxu0 %v1799
    %1907 = vmatpush1.msra.mxu0 %v1798
    %1908 = vmatprep.subr.mxu0 0.0
    %1909 = vmatpush1.msra.mxu0 0.0
    %1910 = vmatprep.subr.mxu0 0.0
    %1911 = vmatpush1.msra.mxu0 0.0
    %1912 = vmatprep.subr.mxu0 0.0
    %1913 = vmatpush1.msra.mxu0 0.0
    %1914 = vmatprep.subr.mxu0 0.0
    %1915 = vmatpush1.msra.mxu0 0.0
    %1916 = vmatprep.subr.mxu0 0.0
    %1917 = vmatpush1.msra.mxu0 0.0
    %1918 = vmatprep.subr.mxu0 0.0
    %1919 = vmatpush1.msra.mxu0 0.0
    %1920 = vmatprep.subr.mxu0 0.0
    %1921 = vmatpush1.msra.mxu0 0.0
    %1922 = vmatprep.subr.mxu0 0.0
    %1923 = vmatpush1.msra.mxu0 0.0
    %1924 = vmatprep.subr.mxu0 0.0
    %1925 = vmatpush1.msra.mxu0 0.0
    %1926 = vmatprep.subr.mxu0 0.0
    %1927 = vmatpush1.msra.mxu0 0.0
    %1928 = vmatprep.subr.mxu0 0.0
    %1929 = vmatpush1.msra.mxu0 0.0
    %1930 = vmatprep.subr.mxu0 0.0
    %1931 = vmatpush1.msra.mxu0 0.0
    %1932 = vmatprep.subr.mxu0 0.0
    %1933 = vmatpush1.msra.mxu0 0.0
    %1934 = vmatprep.subr.mxu0 0.0
    %1935 = vmatpush1.msra.mxu0 0.0
    %1936 = vmatprep.subr.mxu0 0.0
    %1937 = vmatpush1.msra.mxu0 0.0
    %1938 = vmatprep.subr.mxu0 0.0
    %1939 = vmatpush1.msra.mxu0 0.0
    %1940 = vmatprep.mubr.f32.mxu0 0.0
    %1941 = vmatmul.mubr.f32.gmra.mrb[0].mxu0 %v1733
    %v1942 = vpop.f32.mrb[0].mxu0
    %v1943 = vadd.f32 0.0, %v1942
    %v1944 = vpop.f32.mrb[0].mxu0
    %v1945 = vadd.f32 0.0, %v1944
    %1946 = vdwg.mxu0
    %v1947 = vadd.f32 %v1801, %v1872
    %v1948 = vadd.f32 %v1802, %v1874
    %v1949 = vadd.f32 %v1803, %v1943
    %v1950 = vadd.f32 %v1804, %v1945
    %v1951 = vxor.u32 %v1947, 2147483648
    %v1952 = vmul.f32 %v1951, 1.442695
    %v1953 = vpow.pop %v1952
    %v1954 = vadd.f32 %v1953, 1.0
    %v1955 = vrcp.pop %v1954
    %v1956 = vmul.f32 1.0, %v1955
    %v1957 = vxor.u32 %v1948, 2147483648
    %v1958 = vmul.f32 %v1957, 1.442695
    %v1959 = vpow.pop %v1958
    %v1960 = vadd.f32 %v1959, 1.0
    %v1961 = vrcp.pop %v1960
    %v1962 = vmul.f32 1.0, %v1961
    %v1963 = vtanh.pop %v1949
    %v1964 = vxor.u32 %v1950, 2147483648
    %v1965 = vmul.f32 %v1964, 1.442695
    %v1966 = vpow.pop %v1965
    %v1967 = vadd.f32 %v1966, 1.0
    %v1968 = vrcp.pop %v1967
    %v1969 = vmul.f32 1.0, %v1968
    %v1970 = vmul.f32 %v1962, %v1731
    %v1971 = vmul.f32 %v1956, %v1963
    %v1972 = vadd.f32 %v1970, %v1971
    %v1973 = vtanh.pop %v1972
    %v1974 = vmul.f32 %v1969, %v1973
    %s1975 = scalar_lea.vmem [#allocation9], 56
    %1976 = vst [vmem:[%s1975] sm:$0xff] %v1974
    %1977 = vst [vmem:[#allocation2] sm:$0xff] %v1974
    %1978 = vst [vmem:[#allocation3] sm:$0xff] %v1972
    // Predicated region
    $region18: #{tpu_custom_call.1} parent=1 // pred_check
      %p1979 = pneg %p28
    $region19: #{tpu_custom_call.1} parent=1 // pred_check_branch
      %1981 = sbr.rel (%p1979) target = $region21
    $region20: #{tpu_custom_call.1} parent=1 // pred_region
      %1982 = vst [vmem:[#allocation10] sm:$0xff] %v1974
      %1983 = vst [vmem:[#allocation12] sm:$0xff] %v1972
    $region21: #{tpu_custom_call.1} parent=1 // pred_fallthru
      _
    // Predicated region
    $region22: #{tpu_custom_call.1} parent=1 // pred_check
      _
    $region23: #{tpu_custom_call.1} parent=1 // pred_check_branch
      %1985 = sbr.rel (0) target = $region25
    $region24: #{tpu_custom_call.1} parent=1 // pred_region
      %s1987 = ssub.s32 1024, 1024
      %1988 = vsyncadd [#allocation8], %s1987
      %s1989 = sshll.u32 [#allocation9], 4
      %s1990 = int_to_ptr.vmem [resolvable:$true] %s1989
      %1995 = dma.vmem_to_hbm [thread:$0]  %s1990, 1024, %s2, [#allocation8], 128, 128, 8
    $region25: #{tpu_custom_call.1} parent=1 // pred_fallthru
      _
    // Predicated region
    $region26: #{tpu_custom_call.1} parent=1 // pred_check
      _
    $region27: #{tpu_custom_call.1} parent=1 // pred_check_branch
      %1997 = sbr.rel (0) target = $region29
    $region28: #{tpu_custom_call.1} parent=1 // pred_region
      %s1999 = ssub.s32 128, 128
      %2000 = vsyncadd [#allocation11], %s1999
      %s2002 = sshll.u32 [#allocation10], 4
      %s2003 = int_to_ptr.vmem [resolvable:$true] %s2002
      %2005 = dma.vmem_to_hbm [thread:$0]  %s2003, 128, %s3, [#allocation11]
    $region29: #{tpu_custom_call.1} parent=1 // pred_fallthru
      _
    // Predicated region
    $region30: #{tpu_custom_call.1} parent=1 // pred_check
      _
    $region31: #{tpu_custom_call.1} parent=1 // pred_check_branch
      %2007 = sbr.rel (0) target = $region33
    $region32: #{tpu_custom_call.1} parent=1 // pred_region
      %s2009 = ssub.s32 128, 128
      %2010 = vsyncadd [#allocation11], %s2009
      %s2012 = sshll.u32 [#allocation12], 4
      %s2013 = int_to_ptr.vmem [resolvable:$true] %s2012
      %2015 = dma.vmem_to_hbm [thread:$0]  %s2013, 128, %s4, [#allocation11]
    $region33: #{tpu_custom_call.1} parent=1 // pred_fallthru
      _
    // Predicated region
    $region34: #{tpu_custom_call.1} parent=1 // pred_check
      _
    $region35: #{tpu_custom_call.1} parent=1 // pred_check_branch
      %2017 = sbr.rel (0) target = $region37
    $region36: #{tpu_custom_call.1} parent=1 // pred_region
      %2018 = dma.done [#allocation8], 1024
    $region37: #{tpu_custom_call.1} parent=1 // pred_fallthru
      _
    // Predicated region
    $region38: #{tpu_custom_call.1} parent=1 // pred_check
      _
    $region39: #{tpu_custom_call.1} parent=1 // pred_check_branch
      %2020 = sbr.rel (0) target = $region41
    $region40: #{tpu_custom_call.1} parent=1 // pred_region
      %2021 = dma.done [#allocation11], 128
    $region41: #{tpu_custom_call.1} parent=1 // pred_fallthru
      _
    // Predicated region
    $region42: #{tpu_custom_call.1} parent=1 // pred_check
      _
    $region43: #{tpu_custom_call.1} parent=1 // pred_check_branch
      %2023 = sbr.rel (0) target = $region45
    $region44: #{tpu_custom_call.1} parent=1 // pred_region
      %2024 = dma.done [#allocation11], 128
    $region45: #{tpu_custom_call.1} parent=1 // pred_fallthru
      _
    %2025 = vsyncpa [#allocation7], 1
    %2026 = vsyncpa [#allocation8], 1
    %2027 = vsyncpa [#allocation11], 1
  %2028 = vsyncmov [#allocation5]
  %s2029 = vpop.sfrf %2028
  %p2030 = scmp.eq.s32.totalorder %s2029, 0
  %p2031 = pneg %p2030
  %2033 = shalt.err (%p2031)

</llo_original>
